<compile_context>
chip_gen: v7x
topology: tpu7x:2x2x1
jax: 0.10.0
libtpu: 0.0.40
codegen_flags: <defaults>
</compile_context>

<pallas_src>
import functools

import jax
import jax.numpy as jnp
from jax import lax
from jax.experimental import pallas as pl
from jax.experimental.pallas import tpu as pltpu


def _vmem_capacity_bytes():
    """Physical VMEM per TensorCore; conservative 64 MiB fallback (v7x)."""
    try:
        info = pltpu.get_tpu_info()
        for attr in ("vmem_capacity_bytes", "vmem_size_bytes", "vmem_bytes"):
            cap = getattr(info, attr, None)
            if cap:
                return int(cap)
    except Exception:
        pass
    return 64 * 1024 * 1024


def _pool_bn_kernel(*refs, pool_type, k, s, Ho, Wo, eps_eff, has_invc):
    # Ref shapes (per grid step, TC = channel tile, channels-last):
    #   x_ref    : (s*s, N, Hq, Wq, TC)   padded / phase-decomposed input
    #   invc_ref : (1, Ho, Wo, 1)         only for avg pool with padding > 0
    #   gamma/beta: (1, 1, 1, TC)
    #   out_ref  : (N, Ho, Wo, TC)
    if has_invc:
        x_ref, invc_ref, gamma_ref, beta_ref, out_ref = refs
    else:
        x_ref, gamma_ref, beta_ref, out_ref = refs

    # Unrolled pooling taps: every tap is a contiguous static slice of one
    # phase sub-grid, sliced directly from the ref (only acc + one tap live).
    acc = None
    for dh in range(k):
        for dw in range(k):
            ph = (dh % s) * s + (dw % s)          # phase sub-grid
            h0, w0 = dh // s, dw // s             # static offsets within it
            win = x_ref[ph, :, h0:h0 + Ho, w0:w0 + Wo, :].astype(jnp.float32)
            if acc is None:
                acc = win
            elif pool_type == "max":
                acc = jnp.maximum(acc, win)       # VPU
            else:
                acc = acc + win                   # VPU

    # For the avg fast path (has_invc=False, pool_type=='avg') `val` is the raw
    # window SUM; the 1/k^2 divisor is folded into the BN affine below (exact,
    # eps already scaled by k^4 in eps_eff).
    val = acc * invc_ref[...] if has_invc else acc          # (N, Ho, Wo, TC)

    # BatchNorm2d training mode: biased batch stats per channel over (N, Ho, Wo).
    n, ho, wo, _ = val.shape
    inv_m = 1.0 / float(n * ho * wo)

    def chan_sum(v):                              # (N, Ho, Wo, TC) -> (1,1,1,TC)
        partial = jnp.sum(v, axis=(1, 2), keepdims=True)    # lane-preserving
        return jnp.sum(partial, axis=0, keepdims=True)

    mean = chan_sum(val) * inv_m
    diff = val - mean
    var = chan_sum(diff * diff) * inv_m

    # Fold BN into a per-channel affine: 2 VALU ops per element in the apply.
    scale = gamma_ref[...] * lax.rsqrt(var + eps_eff)        # EUP rsqrt
    shift = beta_ref[...] - mean * scale
    out_ref[...] = (val * scale + shift).astype(out_ref.dtype)


def pool_bn(x_nchw, gamma=None, beta=None, *, pool_type, kernel_size,
            stride=1, padding=0, eps=1e-5):
    """PoolBN forward.

    x_nchw: (N, C, H, W) float32 or bfloat16.
    gamma, beta: (C,) BN affine params (None -> gamma=1, beta=0).
    Returns (N, C, Ho, Wo) in the input dtype (PyTorch pooling arithmetic).
    """
    pool_type = pool_type.lower()
    assert pool_type in ("avg", "max"), pool_type
    N, C, H, W = x_nchw.shape
    k, s, p = int(kernel_size), int(stride), int(padding)
    Ho = (H + 2 * p - k) // s + 1
    Wo = (W + 2 * p - k) // s + 1
    assert Ho > 0 and Wo > 0
    Hq = -(-(H + 2 * p) // s)          # ceil((H + 2p) / s)
    Wq = -(-(W + 2 * p) // s)

    if gamma is None:
        gamma = jnp.ones((C,), jnp.float32)
    if beta is None:
        beta = jnp.zeros((C,), jnp.float32)

    x = x_nchw                          # keep original dtype: narrow DMA, upcast in-kernel
    pad_val = -jnp.inf if pool_type == "max" else 0.0

    # Single relayout pass (fused by XLA): NCHW -> NHWC, pooling-identity pad,
    # extend H/W to a stride multiple, and phase-decompose so every pooling tap
    # becomes a contiguous static slice inside the kernel.  For stride==1 the
    # phase step is a pure reshape (no data movement beyond the NHWC relayout).
    x_nhwc = jnp.transpose(x, (0, 2, 3, 1))                              # (N,H,W,C)
    xp = jnp.pad(x_nhwc,
                 ((0, 0), (p, s * Hq - H - p), (p, s * Wq - W - p), (0, 0)),
                 constant_values=pad_val)                                # (N,sHq,sWq,C)
    xp = xp.reshape(N, Hq, s, Wq, s, C)
    xp = jnp.transpose(xp, (2, 4, 0, 1, 3, 5)).reshape(s * s, N, Hq, Wq, C)

    # Avg-pool fast path: constant window count (no padding) -> fold 1/k^2 into
    # the BN affine (eps scaled by k^4, exact).  Otherwise use a per-position
    # divisor for count_include_pad=False.
    has_invc = (pool_type == "avg" and p > 0)
    eps_eff = float(eps) * float(k * k) ** 2 if (pool_type == "avg" and not has_invc) \
        else float(eps)

    # Generation-aware block sizing: budget per grid-step block ~ VMEM/16
    # (8 MiB on 128 MiB v5e/v6e, 4 MiB on 64 MiB v7x), scoped limit ~ 3/4 VMEM.
    vmem_cap = _vmem_capacity_bytes()
    block_budget = max(vmem_cap // 16, 4 * 1024 * 1024)
    vmem_limit = int(vmem_cap * 3 // 4)

    itemsize = jnp.dtype(x.dtype).itemsize
    per_chan_bytes = s * s * N * Hq * Wq * itemsize + N * Ho * Wo * itemsize

    # Channel tiles must keep the lane axis layout-friendly: a multiple of 128
    # or all of C.  Prefer the largest fitting tile that still leaves >=2 grid
    # steps so the "parallel" axis shards across v7x's two TensorCores.
    allowed = [d for d in range(1, C + 1) if C % d == 0 and (d % 128 == 0 or d == C)]
    fitting = [d for d in allowed if d * per_chan_bytes <= block_budget]
    multi = [d for d in fitting if C // d >= 2]
    if multi:
        tile_c = max(multi)
    elif fitting:
        tile_c = max(fitting)
    else:
        tile_c = min(allowed)
        # TODO(synk): two-pass BN fallback (spatial/batch grid axis marked
        # "arbitrary" with stats accumulators + pl.when finalize) for channel
        # slabs that exceed VMEM even at the smallest lane-aligned tile.

    grid = (C // tile_c,)
    in_specs = [pl.BlockSpec((s * s, N, Hq, Wq, tile_c),
                             lambda i: (0, 0, 0, 0, i))]
    args = [xp]
    if has_invc:
        # Per-position divisor for count_include_pad=False (data independent).
        ones = jnp.pad(jnp.ones((H, W), jnp.float32),
                       ((p, s * Hq - H - p), (p, s * Wq - W - p)))
        cnt = jnp.zeros((Ho, Wo), jnp.float32)
        for dh in range(k):
            for dw in range(k):
                cnt = cnt + ones[dh::s, dw::s][:Ho, :Wo]
        args.append((1.0 / cnt).reshape(1, Ho, Wo, 1))
        in_specs.append(pl.BlockSpec((1, Ho, Wo, 1), lambda i: (0, 0, 0, 0)))
    args += [gamma.astype(jnp.float32).reshape(1, 1, 1, C),
             beta.astype(jnp.float32).reshape(1, 1, 1, C)]
    in_specs += [pl.BlockSpec((1, 1, 1, tile_c), lambda i: (0, 0, 0, i)),
                 pl.BlockSpec((1, 1, 1, tile_c), lambda i: (0, 0, 0, i))]

    kernel = functools.partial(_pool_bn_kernel, pool_type=pool_type, k=k, s=s,
                               Ho=Ho, Wo=Wo, eps_eff=eps_eff, has_invc=has_invc)
    out_nhwc = pl.pallas_call(
        kernel,
        out_shape=jax.ShapeDtypeStruct((N, Ho, Wo, C), x.dtype),
        grid=grid,
        in_specs=in_specs,
        out_specs=pl.BlockSpec((N, Ho, Wo, tile_c), lambda i: (0, 0, 0, i)),
        compiler_params=pltpu.CompilerParams(
            dimension_semantics=("parallel",),
            vmem_limit_bytes=vmem_limit),
    )(*args)
    # Present the PyTorch-layout result (NCHW); the kernel stores lane-dense NHWC.
    return jnp.transpose(out_nhwc, (0, 3, 1, 2))


def _reference(x, gamma, beta, *, pool_type, kernel_size, stride, padding, eps=1e-5):
    """Pure-JAX reference mirroring the PyTorch PoolBN forward (training-mode BN)."""
    k, s, p = kernel_size, stride, padding
    pads = ((0, 0), (0, 0), (p, p), (p, p))
    if pool_type == "max":
        pooled = lax.reduce_window(x, -jnp.inf, lax.max,
                                   (1, 1, k, k), (1, 1, s, s), pads)
    else:
        summed = lax.reduce_window(x, 0.0, lax.add,
                                   (1, 1, k, k), (1, 1, s, s), pads)
        cnt = lax.reduce_window(jnp.ones_like(x), 0.0, lax.add,
                                (1, 1, k, k), (1, 1, s, s), pads)
        pooled = summed / cnt                            # count_include_pad=False
    mean = jnp.mean(pooled, axis=(0, 2, 3), keepdims=True)
    var = jnp.mean((pooled - mean) ** 2, axis=(0, 2, 3), keepdims=True)
    g = gamma.reshape(1, -1, 1, 1)
    b = beta.reshape(1, -1, 1, 1)
    return (pooled - mean) / jnp.sqrt(var + eps) * g + b


if __name__ == "__main__":
    key = jax.random.PRNGKey(0)
    N, C, H, W = 2, 4, 16, 16
    x = jax.random.normal(key, (N, C, H, W), dtype=jnp.float32)
    # BatchNorm2d default affine init: weight = 1, bias = 0
    gamma = jnp.ones((C,), jnp.float32)
    beta = jnp.zeros((C,), jnp.float32)

    configs = [  # (pool_type, kernel_size, stride, padding) — typical NAS usages
        ("max", 3, 1, 1),
        ("avg", 3, 1, 1),
        ("max", 3, 2, 1),
        ("avg", 2, 2, 0),   # exercises the folded-divisor fast path
    ]
    for pool_type, k, s, p in configs:
        out = jax.block_until_ready(
            pool_bn(x, gamma, beta, pool_type=pool_type,
                    kernel_size=k, stride=s, padding=p))
        ref = _reference(x, gamma, beta, pool_type=pool_type,
                         kernel_size=k, stride=s, padding=p)
        Ho = (H + 2 * p - k) // s + 1
        Wo = (W + 2 * p - k) // s + 1
        assert out.shape == (N, C, Ho, Wo), (pool_type, out.shape)
        err = float(jnp.max(jnp.abs(out - ref)))
        assert err < 5e-4, (pool_type, k, s, p, err)

    # bf16 input path: narrow DMA, f32 stats in-kernel, bf16 output.
    xb = x.astype(jnp.bfloat16)
    outb = jax.block_until_ready(
        pool_bn(xb, gamma, beta, pool_type="avg", kernel_size=3, stride=1, padding=1))
    refb = _reference(xb.astype(jnp.float32), gamma, beta,
                      pool_type="avg", kernel_size=3, stride=1, padding=1)
    errb = float(jnp.max(jnp.abs(outb.astype(jnp.float32) - refb)))
    assert errb < 5e-2, errb

    print("KERNEL_OK")
</pallas_src>

<mosaic_0001>
module attributes {stable_mosaic.version = 11 : i64} {
  func.func @_pool_bn_kernel(%arg0: i32, %arg1: memref<1x2x18x18x4xf32, #tpu.memory_space<vmem>>, %arg2: memref<1x1x1x4xf32, #tpu.memory_space<vmem>>, %arg3: memref<1x1x1x4xf32, #tpu.memory_space<vmem>>, %arg4: memref<2x16x16x4xf32, #tpu.memory_space<vmem>>) attributes {dimension_semantics = [#tpu.dimension_semantics<parallel>], iteration_bounds = array<i64: 1>, scalar_prefetch = 0 : i64, scratch_operands = 0 : i64, tpu.core_type = #tpu.core_type<tc>, window_params = [{transform_indices = @transform_0, window_bounds = array<i64: 1, 2, 18, 18, 4>}, {transform_indices = @transform_1, window_bounds = array<i64: 1, 1, 1, 4>}, {transform_indices = @transform_2, window_bounds = array<i64: 1, 1, 1, 4>}, {transform_indices = @transform_3, window_bounds = array<i64: 2, 16, 16, 4>}]} {
    %c0 = arith.constant 0 : index
    %c0_0 = arith.constant 0 : index
    %c0_1 = arith.constant 0 : index
    %c0_2 = arith.constant 0 : index
    %c0_3 = arith.constant 0 : index
    %0 = vector.load %arg1[%c0, %c0_0, %c0_1, %c0_2, %c0_3] : memref<1x2x18x18x4xf32, #tpu.memory_space<vmem>>, vector<1x2x16x16x4xf32>
    %1 = vector.shape_cast %0 : vector<1x2x16x16x4xf32> to vector<2x16x16x4xf32>
    %c0_4 = arith.constant 0 : index
    %c0_5 = arith.constant 0 : index
    %c0_6 = arith.constant 0 : index
    %c1 = arith.constant 1 : index
    %c0_7 = arith.constant 0 : index
    %2 = vector.load %arg1[%c0_4, %c0_5, %c0_6, %c1, %c0_7] : memref<1x2x18x18x4xf32, #tpu.memory_space<vmem>>, vector<1x2x16x16x4xf32>
    %3 = vector.shape_cast %2 : vector<1x2x16x16x4xf32> to vector<2x16x16x4xf32>
    %4 = arith.maximumf %1, %3 : vector<2x16x16x4xf32>
    %c0_8 = arith.constant 0 : index
    %c0_9 = arith.constant 0 : index
    %c0_10 = arith.constant 0 : index
    %c2 = arith.constant 2 : index
    %c0_11 = arith.constant 0 : index
    %5 = vector.load %arg1[%c0_8, %c0_9, %c0_10, %c2, %c0_11] : memref<1x2x18x18x4xf32, #tpu.memory_space<vmem>>, vector<1x2x16x16x4xf32>
    %6 = vector.shape_cast %5 : vector<1x2x16x16x4xf32> to vector<2x16x16x4xf32>
    %7 = arith.maximumf %4, %6 : vector<2x16x16x4xf32>
    %c0_12 = arith.constant 0 : index
    %c0_13 = arith.constant 0 : index
    %c1_14 = arith.constant 1 : index
    %c0_15 = arith.constant 0 : index
    %c0_16 = arith.constant 0 : index
    %8 = vector.load %arg1[%c0_12, %c0_13, %c1_14, %c0_15, %c0_16] : memref<1x2x18x18x4xf32, #tpu.memory_space<vmem>>, vector<1x2x16x16x4xf32>
    %9 = vector.shape_cast %8 : vector<1x2x16x16x4xf32> to vector<2x16x16x4xf32>
    %10 = arith.maximumf %7, %9 : vector<2x16x16x4xf32>
    %c0_17 = arith.constant 0 : index
    %c0_18 = arith.constant 0 : index
    %c1_19 = arith.constant 1 : index
    %c1_20 = arith.constant 1 : index
    %c0_21 = arith.constant 0 : index
    %11 = vector.load %arg1[%c0_17, %c0_18, %c1_19, %c1_20, %c0_21] : memref<1x2x18x18x4xf32, #tpu.memory_space<vmem>>, vector<1x2x16x16x4xf32>
    %12 = vector.shape_cast %11 : vector<1x2x16x16x4xf32> to vector<2x16x16x4xf32>
    %13 = arith.maximumf %10, %12 : vector<2x16x16x4xf32>
    %c0_22 = arith.constant 0 : index
    %c0_23 = arith.constant 0 : index
    %c1_24 = arith.constant 1 : index
    %c2_25 = arith.constant 2 : index
    %c0_26 = arith.constant 0 : index
    %14 = vector.load %arg1[%c0_22, %c0_23, %c1_24, %c2_25, %c0_26] : memref<1x2x18x18x4xf32, #tpu.memory_space<vmem>>, vector<1x2x16x16x4xf32>
    %15 = vector.shape_cast %14 : vector<1x2x16x16x4xf32> to vector<2x16x16x4xf32>
    %16 = arith.maximumf %13, %15 : vector<2x16x16x4xf32>
    %c0_27 = arith.constant 0 : index
    %c0_28 = arith.constant 0 : index
    %c2_29 = arith.constant 2 : index
    %c0_30 = arith.constant 0 : index
    %c0_31 = arith.constant 0 : index
    %17 = vector.load %arg1[%c0_27, %c0_28, %c2_29, %c0_30, %c0_31] : memref<1x2x18x18x4xf32, #tpu.memory_space<vmem>>, vector<1x2x16x16x4xf32>
    %18 = vector.shape_cast %17 : vector<1x2x16x16x4xf32> to vector<2x16x16x4xf32>
    %19 = arith.maximumf %16, %18 : vector<2x16x16x4xf32>
    %c0_32 = arith.constant 0 : index
    %c0_33 = arith.constant 0 : index
    %c2_34 = arith.constant 2 : index
    %c1_35 = arith.constant 1 : index
    %c0_36 = arith.constant 0 : index
    %20 = vector.load %arg1[%c0_32, %c0_33, %c2_34, %c1_35, %c0_36] : memref<1x2x18x18x4xf32, #tpu.memory_space<vmem>>, vector<1x2x16x16x4xf32>
    %21 = vector.shape_cast %20 : vector<1x2x16x16x4xf32> to vector<2x16x16x4xf32>
    %22 = arith.maximumf %19, %21 : vector<2x16x16x4xf32>
    %c0_37 = arith.constant 0 : index
    %c0_38 = arith.constant 0 : index
    %c2_39 = arith.constant 2 : index
    %c2_40 = arith.constant 2 : index
    %c0_41 = arith.constant 0 : index
    %23 = vector.load %arg1[%c0_37, %c0_38, %c2_39, %c2_40, %c0_41] : memref<1x2x18x18x4xf32, #tpu.memory_space<vmem>>, vector<1x2x16x16x4xf32>
    %24 = vector.shape_cast %23 : vector<1x2x16x16x4xf32> to vector<2x16x16x4xf32>
    %25 = arith.maximumf %22, %24 : vector<2x16x16x4xf32>
    %cst = arith.constant dense<0.000000e+00> : vector<2x4xf32>
    %26 = vector.multi_reduction <add>, %25, %cst [1, 2] : vector<2x16x16x4xf32> to vector<2x4xf32>
    %27 = vector.shape_cast %26 : vector<2x4xf32> to vector<2x1x1x4xf32>
    %cst_42 = arith.constant dense<0.000000e+00> : vector<1x1x4xf32>
    %28 = vector.multi_reduction <add>, %27, %cst_42 [0] : vector<2x1x1x4xf32> to vector<1x1x4xf32>
    %29 = vector.shape_cast %28 : vector<1x1x4xf32> to vector<1x1x1x4xf32>
    %cst_43 = arith.constant 0.001953125 : f32
    %30 = vector.broadcast %cst_43 : f32 to vector<1x1x1x4xf32>
    %31 = arith.mulf %29, %30 : vector<1x1x1x4xf32>
    %32 = vector.broadcast %31 : vector<1x1x1x4xf32> to vector<2x16x16x4xf32>
    %33 = arith.subf %25, %32 : vector<2x16x16x4xf32>
    %34 = arith.mulf %33, %33 : vector<2x16x16x4xf32>
    %cst_44 = arith.constant dense<0.000000e+00> : vector<2x4xf32>
    %35 = vector.multi_reduction <add>, %34, %cst_44 [1, 2] : vector<2x16x16x4xf32> to vector<2x4xf32>
    %36 = vector.shape_cast %35 : vector<2x4xf32> to vector<2x1x1x4xf32>
    %cst_45 = arith.constant dense<0.000000e+00> : vector<1x1x4xf32>
    %37 = vector.multi_reduction <add>, %36, %cst_45 [0] : vector<2x1x1x4xf32> to vector<1x1x4xf32>
    %38 = vector.shape_cast %37 : vector<1x1x4xf32> to vector<1x1x1x4xf32>
    %cst_46 = arith.constant 0.001953125 : f32
    %39 = vector.broadcast %cst_46 : f32 to vector<1x1x1x4xf32>
    %40 = arith.mulf %38, %39 : vector<1x1x1x4xf32>
    %c0_47 = arith.constant 0 : index
    %c0_48 = arith.constant 0 : index
    %c0_49 = arith.constant 0 : index
    %c0_50 = arith.constant 0 : index
    %41 = vector.load %arg2[%c0_47, %c0_48, %c0_49, %c0_50] : memref<1x1x1x4xf32, #tpu.memory_space<vmem>>, vector<1x1x1x4xf32>
    %cst_51 = arith.constant 9.99999974E-6 : f32
    %42 = vector.broadcast %cst_51 : f32 to vector<1x1x1x4xf32>
    %43 = arith.addf %40, %42 : vector<1x1x1x4xf32>
    %44 = math.rsqrt %43 : vector<1x1x1x4xf32>
    %45 = arith.mulf %41, %44 : vector<1x1x1x4xf32>
    %c0_52 = arith.constant 0 : index
    %c0_53 = arith.constant 0 : index
    %c0_54 = arith.constant 0 : index
    %c0_55 = arith.constant 0 : index
    %46 = vector.load %arg3[%c0_52, %c0_53, %c0_54, %c0_55] : memref<1x1x1x4xf32, #tpu.memory_space<vmem>>, vector<1x1x1x4xf32>
    %47 = arith.mulf %31, %45 : vector<1x1x1x4xf32>
    %48 = arith.subf %46, %47 : vector<1x1x1x4xf32>
    %49 = vector.broadcast %45 : vector<1x1x1x4xf32> to vector<2x16x16x4xf32>
    %50 = arith.mulf %25, %49 : vector<2x16x16x4xf32>
    %51 = vector.broadcast %48 : vector<1x1x1x4xf32> to vector<2x16x16x4xf32>
    %52 = arith.addf %50, %51 : vector<2x16x16x4xf32>
    %c0_56 = arith.constant 0 : index
    %c0_57 = arith.constant 0 : index
    %c0_58 = arith.constant 0 : index
    %c0_59 = arith.constant 0 : index
    %53 = vector.load %arg4[%c0_56, %c0_57, %c0_58, %c0_59] : memref<2x16x16x4xf32, #tpu.memory_space<vmem>>, vector<2x16x16x4xf32>
    tpu.vector_store %arg4[%c0_56, %c0_57, %c0_58, %c0_59], %52 {strides = array<i32>} : memref<2x16x16x4xf32, #tpu.memory_space<vmem>>, vector<2x16x16x4xf32>,
    return
  }
  func.func @transform_0(%arg0: i32) -> (i32, i32, i32, i32, i32) {
    %c0_i32 = arith.constant 0 : i32
    %c0_i32_0 = arith.constant 0 : i32
    %c0_i32_1 = arith.constant 0 : i32
    %c0_i32_2 = arith.constant 0 : i32
    %c0_i32_3 = arith.constant 0 : i32
    return %c0_i32, %c0_i32_0, %c0_i32_1, %c0_i32_2, %arg0 : i32, i32, i32, i32, i32
  }
  func.func @transform_1(%arg0: i32) -> (i32, i32, i32, i32) {
    %c0_i32 = arith.constant 0 : i32
    %c0_i32_0 = arith.constant 0 : i32
    %c0_i32_1 = arith.constant 0 : i32
    %c0_i32_2 = arith.constant 0 : i32
    return %c0_i32, %c0_i32_0, %c0_i32_1, %arg0 : i32, i32, i32, i32
  }
  func.func @transform_2(%arg0: i32) -> (i32, i32, i32, i32) {
    %c0_i32 = arith.constant 0 : i32
    %c0_i32_0 = arith.constant 0 : i32
    %c0_i32_1 = arith.constant 0 : i32
    %c0_i32_2 = arith.constant 0 : i32
    return %c0_i32, %c0_i32_0, %c0_i32_1, %arg0 : i32, i32, i32, i32
  }
  func.func @transform_3(%arg0: i32) -> (i32, i32, i32, i32) {
    %c0_i32 = arith.constant 0 : i32
    %c0_i32_0 = arith.constant 0 : i32
    %c0_i32_1 = arith.constant 0 : i32
    %c0_i32_2 = arith.constant 0 : i32
    return %c0_i32, %c0_i32_0, %c0_i32_1, %arg0 : i32, i32, i32, i32
  }
}

</mosaic_0001>

<llo_original>
// kernel: tpu_custom_call.1
$region0: #{tpu_custom_call.1}
  #allocation0 [shape = 'u32[]', space=smem, size = 0x4, offset = 0x4, fixed_abs, tag = 'smem constant byte address 0x4 - core index']
  #allocation1 [shape = 'u32[144,128]{1,0:T(1,128)}', space=vmem, size = 0x12000, scoped, tag = 'internal scratch']
  %s0 = inlined_call_operand.vmem [shape: f32[1,2,18,18,4], index: 0, kind: input, shape index: {}]
  %s1 = inlined_call_operand.vmem [shape: f32[1,1,1,4], index: 1, kind: input, shape index: {}]
  %s2 = inlined_call_operand.vmem [shape: f32[1,1,1,4], index: 2, kind: input, shape index: {}]
  %s3 = inlined_call_operand.vmem [shape: f32[2,16,16,4], index: 3, kind: output, shape index: {}]
  %s4 = sld [smem:[#allocation0]]
  $region22: #{tpu_custom_call.1} parent=0
    _
  %s6 = ssub.s32 1, %s4
  %s7 = scalar_select 0, %s6, %s4
  // Predicated region
  $region2: #{tpu_custom_call.1} parent=0 // pred_check
    _
  $region3: #{tpu_custom_call.1} parent=0 // pred_check_branch
    %9 = sbr.rel (0) target = $region5
  $region4: #{tpu_custom_call.1} parent=0 // pred_region
    _
  $region5: #{tpu_custom_call.1} parent=0 // pred_fallthru
    _
  // Predicated region
  $region6: #{tpu_custom_call.1} parent=0 // pred_check
    _
  $region7: #{tpu_custom_call.1} parent=0 // pred_check_branch
    %11 = sbr.rel (0) target = $region9
  $region8: #{tpu_custom_call.1} parent=0 // pred_region
    _
  $region9: #{tpu_custom_call.1} parent=0 // pred_fallthru
    _
  // Predicated region
  $region10: #{tpu_custom_call.1} parent=0 // pred_check
    _
  $region11: #{tpu_custom_call.1} parent=0 // pred_check_branch
    %13 = sbr.rel (0) target = $region13
  $region12: #{tpu_custom_call.1} parent=0 // pred_region
    _
  $region13: #{tpu_custom_call.1} parent=0 // pred_fallthru
    _
  %v14 = vld [vmem:[%s0] sm:$0xff]
  %v15 = vld [vmem:[%s0 + $0x8] sm:$0xff]
  %v16 = vld [vmem:[%s0 + $0x18] sm:$0xff]
  %v17 = vld [vmem:[%s0 + $0x20] sm:$0xff]
  %v18 = vld [vmem:[%s0 + $0x30] sm:$0xff]
  %v19 = vld [vmem:[%s0 + $0x38] sm:$0xff]
  %v20 = vld [vmem:[%s0 + $0x48] sm:$0xff]
  %v21 = vld [vmem:[%s0 + $0x50] sm:$0xff]
  %v22 = vld [vmem:[%s0 + $0x60] sm:$0xff]
  %v23 = vld [vmem:[%s0 + $0x68] sm:$0xff]
  %v24 = vld [vmem:[%s0 + $0x78] sm:$0xff]
  %v25 = vld [vmem:[%s0 + $0x80] sm:$0xff]
  %v26 = vld [vmem:[%s0 + $0x90] sm:$0xff]
  %v27 = vld [vmem:[%s0 + $0x98] sm:$0xff]
  %v28 = vld [vmem:[%s0 + $0xa8] sm:$0xff]
  %v29 = vld [vmem:[%s0 + $0xb0] sm:$0xff]
  %v30 = vld [vmem:[%s0 + $0xc0] sm:$0xff]
  %v31 = vld [vmem:[%s0 + $0xc8] sm:$0xff]
  %v32 = vld [vmem:[%s0 + $0xd8] sm:$0xff]
  %v33 = vld [vmem:[%s0 + $0xe0] sm:$0xff]
  %v34 = vld [vmem:[%s0 + $0xf0] sm:$0xff]
  %v35 = vld [vmem:[%s0 + $0xf8] sm:$0xff]
  %v36 = vld [vmem:[%s0 + $0x108] sm:$0xff]
  %v37 = vld [vmem:[%s0 + $0x110] sm:$0xff]
  %v38 = vld [vmem:[%s0 + $0x120] sm:$0xff]
  %v39 = vld [vmem:[%s0 + $0x128] sm:$0xff]
  %v40 = vld [vmem:[%s0 + $0x138] sm:$0xff]
  %v41 = vld [vmem:[%s0 + $0x140] sm:$0xff]
  %v42 = vld [vmem:[%s0 + $0x150] sm:$0xff]
  %v43 = vld [vmem:[%s0 + $0x158] sm:$0xff]
  %v44 = vld [vmem:[%s0 + $0x168] sm:$0xff]
  %v45 = vld [vmem:[%s0 + $0x170] sm:$0xff]
  %v46 = vld [vmem:[%s0 + $0x1b0] sm:$0xff]
  %v47 = vld [vmem:[%s0 + $0x1b8] sm:$0xff]
  %v48 = vld [vmem:[%s0 + $0x1c8] sm:$0xff]
  %v49 = vld [vmem:[%s0 + $0x1d0] sm:$0xff]
  %v50 = vld [vmem:[%s0 + $0x1e0] sm:$0xff]
  %v51 = vld [vmem:[%s0 + $0x1e8] sm:$0xff]
  %v52 = vld [vmem:[%s0 + $0x1f8] sm:$0xff]
  %v53 = vld [vmem:[%s0 + $0x200] sm:$0xff]
  %v54 = vld [vmem:[%s0 + $0x210] sm:$0xff]
  %v55 = vld [vmem:[%s0 + $0x218] sm:$0xff]
  %v56 = vld [vmem:[%s0 + $0x228] sm:$0xff]
  %v57 = vld [vmem:[%s0 + $0x230] sm:$0xff]
  %v58 = vld [vmem:[%s0 + $0x240] sm:$0xff]
  %v59 = vld [vmem:[%s0 + $0x248] sm:$0xff]
  %v60 = vld [vmem:[%s0 + $0x258] sm:$0xff]
  %v61 = vld [vmem:[%s0 + $0x260] sm:$0xff]
  %v62 = vld [vmem:[%s0 + $0x270] sm:$0xff]
  %v63 = vld [vmem:[%s0 + $0x278] sm:$0xff]
  %v64 = vld [vmem:[%s0 + $0x288] sm:$0xff]
  %v65 = vld [vmem:[%s0 + $0x290] sm:$0xff]
  %v66 = vld [vmem:[%s0 + $0x2a0] sm:$0xff]
  %v67 = vld [vmem:[%s0 + $0x2a8] sm:$0xff]
  %v68 = vld [vmem:[%s0 + $0x2b8] sm:$0xff]
  %v69 = vld [vmem:[%s0 + $0x2c0] sm:$0xff]
  %v70 = vld [vmem:[%s0 + $0x2d0] sm:$0xff]
  %v71 = vld [vmem:[%s0 + $0x2d8] sm:$0xff]
  %v72 = vld [vmem:[%s0 + $0x2e8] sm:$0xff]
  %v73 = vld [vmem:[%s0 + $0x2f0] sm:$0xff]
  %v74 = vld [vmem:[%s0 + $0x300] sm:$0xff]
  %v75 = vld [vmem:[%s0 + $0x308] sm:$0xff]
  %v76 = vld [vmem:[%s0 + $0x318] sm:$0xff]
  %v77 = vld [vmem:[%s0 + $0x320] sm:$0xff]
  %v78 = vld [vmem:[%s0 + $0x1] sm:$0xff]
  %v79 = vld [vmem:[%s0 + $0x9] sm:$0xff]
  %v80 = vld [vmem:[%s0 + $0x19] sm:$0xff]
  %v81 = vld [vmem:[%s0 + $0x21] sm:$0xff]
  %v82 = vld [vmem:[%s0 + $0x31] sm:$0xff]
  %v83 = vld [vmem:[%s0 + $0x39] sm:$0xff]
  %v84 = vld [vmem:[%s0 + $0x49] sm:$0xff]
  %v85 = vld [vmem:[%s0 + $0x51] sm:$0xff]
  %v86 = vld [vmem:[%s0 + $0x61] sm:$0xff]
  %v87 = vld [vmem:[%s0 + $0x69] sm:$0xff]
  %v88 = vld [vmem:[%s0 + $0x79] sm:$0xff]
  %v89 = vld [vmem:[%s0 + $0x81] sm:$0xff]
  %v90 = vld [vmem:[%s0 + $0x91] sm:$0xff]
  %v91 = vld [vmem:[%s0 + $0x99] sm:$0xff]
  %v92 = vld [vmem:[%s0 + $0xa9] sm:$0xff]
  %v93 = vld [vmem:[%s0 + $0xb1] sm:$0xff]
  %v94 = vld [vmem:[%s0 + $0xc1] sm:$0xff]
  %v95 = vld [vmem:[%s0 + $0xc9] sm:$0xff]
  %v96 = vld [vmem:[%s0 + $0xd9] sm:$0xff]
  %v97 = vld [vmem:[%s0 + $0xe1] sm:$0xff]
  %v98 = vld [vmem:[%s0 + $0xf1] sm:$0xff]
  %v99 = vld [vmem:[%s0 + $0xf9] sm:$0xff]
  %v100 = vld [vmem:[%s0 + $0x109] sm:$0xff]
  %v101 = vld [vmem:[%s0 + $0x111] sm:$0xff]
  %v102 = vld [vmem:[%s0 + $0x121] sm:$0xff]
  %v103 = vld [vmem:[%s0 + $0x129] sm:$0xff]
  %v104 = vld [vmem:[%s0 + $0x139] sm:$0xff]
  %v105 = vld [vmem:[%s0 + $0x141] sm:$0xff]
  %v106 = vld [vmem:[%s0 + $0x151] sm:$0xff]
  %v107 = vld [vmem:[%s0 + $0x159] sm:$0xff]
  %v108 = vld [vmem:[%s0 + $0x169] sm:$0xff]
  %v109 = vld [vmem:[%s0 + $0x171] sm:$0xff]
  %v110 = vld [vmem:[%s0 + $0x1b1] sm:$0xff]
  %v111 = vld [vmem:[%s0 + $0x1b9] sm:$0xff]
  %v112 = vld [vmem:[%s0 + $0x1c9] sm:$0xff]
  %v113 = vld [vmem:[%s0 + $0x1d1] sm:$0xff]
  %v114 = vld [vmem:[%s0 + $0x1e1] sm:$0xff]
  %v115 = vld [vmem:[%s0 + $0x1e9] sm:$0xff]
  %v116 = vld [vmem:[%s0 + $0x1f9] sm:$0xff]
  %v117 = vld [vmem:[%s0 + $0x201] sm:$0xff]
  %v118 = vld [vmem:[%s0 + $0x211] sm:$0xff]
  %v119 = vld [vmem:[%s0 + $0x219] sm:$0xff]
  %v120 = vld [vmem:[%s0 + $0x229] sm:$0xff]
  %v121 = vld [vmem:[%s0 + $0x231] sm:$0xff]
  %v122 = vld [vmem:[%s0 + $0x241] sm:$0xff]
  %v123 = vld [vmem:[%s0 + $0x249] sm:$0xff]
  %v124 = vld [vmem:[%s0 + $0x259] sm:$0xff]
  %v125 = vld [vmem:[%s0 + $0x261] sm:$0xff]
  %v126 = vld [vmem:[%s0 + $0x271] sm:$0xff]
  %v127 = vld [vmem:[%s0 + $0x279] sm:$0xff]
  %v128 = vld [vmem:[%s0 + $0x289] sm:$0xff]
  %v129 = vld [vmem:[%s0 + $0x291] sm:$0xff]
  %v130 = vld [vmem:[%s0 + $0x2a1] sm:$0xff]
  %v131 = vld [vmem:[%s0 + $0x2a9] sm:$0xff]
  %v132 = vld [vmem:[%s0 + $0x2b9] sm:$0xff]
  %v133 = vld [vmem:[%s0 + $0x2c1] sm:$0xff]
  %v134 = vld [vmem:[%s0 + $0x2d1] sm:$0xff]
  %v135 = vld [vmem:[%s0 + $0x2d9] sm:$0xff]
  %v136 = vld [vmem:[%s0 + $0x2e9] sm:$0xff]
  %v137 = vld [vmem:[%s0 + $0x2f1] sm:$0xff]
  %v138 = vld [vmem:[%s0 + $0x301] sm:$0xff]
  %v139 = vld [vmem:[%s0 + $0x309] sm:$0xff]
  %v140 = vld [vmem:[%s0 + $0x319] sm:$0xff]
  %v141 = vld [vmem:[%s0 + $0x321] sm:$0xff]
  %v142 = vmax.f32 %v14, %v78
  %v143 = vmax.f32 %v15, %v79
  %v144 = vmax.f32 %v16, %v80
  %v145 = vmax.f32 %v17, %v81
  %v146 = vmax.f32 %v18, %v82
  %v147 = vmax.f32 %v19, %v83
  %v148 = vmax.f32 %v20, %v84
  %v149 = vmax.f32 %v21, %v85
  %v150 = vmax.f32 %v22, %v86
  %v151 = vmax.f32 %v23, %v87
  %v152 = vmax.f32 %v24, %v88
  %v153 = vmax.f32 %v25, %v89
  %v154 = vmax.f32 %v26, %v90
  %v155 = vmax.f32 %v27, %v91
  %v156 = vmax.f32 %v28, %v92
  %v157 = vmax.f32 %v29, %v93
  %v158 = vmax.f32 %v30, %v94
  %v159 = vmax.f32 %v31, %v95
  %v160 = vmax.f32 %v32, %v96
  %v161 = vmax.f32 %v33, %v97
  %v162 = vmax.f32 %v34, %v98
  %v163 = vmax.f32 %v35, %v99
  %v164 = vmax.f32 %v36, %v100
  %v165 = vmax.f32 %v37, %v101
  %v166 = vmax.f32 %v38, %v102
  %v167 = vmax.f32 %v39, %v103
  %v168 = vmax.f32 %v40, %v104
  %v169 = vmax.f32 %v41, %v105
  %v170 = vmax.f32 %v42, %v106
  %v171 = vmax.f32 %v43, %v107
  %v172 = vmax.f32 %v44, %v108
  %v173 = vmax.f32 %v45, %v109
  %v174 = vmax.f32 %v46, %v110
  %v175 = vmax.f32 %v47, %v111
  %v176 = vmax.f32 %v48, %v112
  %v177 = vmax.f32 %v49, %v113
  %v178 = vmax.f32 %v50, %v114
  %v179 = vmax.f32 %v51, %v115
  %v180 = vmax.f32 %v52, %v116
  %v181 = vmax.f32 %v53, %v117
  %v182 = vmax.f32 %v54, %v118
  %v183 = vmax.f32 %v55, %v119
  %v184 = vmax.f32 %v56, %v120
  %v185 = vmax.f32 %v57, %v121
  %v186 = vmax.f32 %v58, %v122
  %v187 = vmax.f32 %v59, %v123
  %v188 = vmax.f32 %v60, %v124
  %v189 = vmax.f32 %v61, %v125
  %v190 = vmax.f32 %v62, %v126
  %v191 = vmax.f32 %v63, %v127
  %v192 = vmax.f32 %v64, %v128
  %v193 = vmax.f32 %v65, %v129
  %v194 = vmax.f32 %v66, %v130
  %v195 = vmax.f32 %v67, %v131
  %v196 = vmax.f32 %v68, %v132
  %v197 = vmax.f32 %v69, %v133
  %v198 = vmax.f32 %v70, %v134
  %v199 = vmax.f32 %v71, %v135
  %v200 = vmax.f32 %v72, %v136
  %v201 = vmax.f32 %v73, %v137
  %v202 = vmax.f32 %v74, %v138
  %v203 = vmax.f32 %v75, %v139
  %v204 = vmax.f32 %v76, %v140
  %v205 = vmax.f32 %v77, %v141
  %v206 = vld [vmem:[%s0 + $0x2] sm:$0xff]
  %v207 = vld [vmem:[%s0 + $0xa] sm:$0xff]
  %v208 = vld [vmem:[%s0 + $0x1a] sm:$0xff]
  %v209 = vld [vmem:[%s0 + $0x22] sm:$0xff]
  %v210 = vld [vmem:[%s0 + $0x32] sm:$0xff]
  %v211 = vld [vmem:[%s0 + $0x3a] sm:$0xff]
  %v212 = vld [vmem:[%s0 + $0x4a] sm:$0xff]
  %v213 = vld [vmem:[%s0 + $0x52] sm:$0xff]
  %v214 = vld [vmem:[%s0 + $0x62] sm:$0xff]
  %v215 = vld [vmem:[%s0 + $0x6a] sm:$0xff]
  %v216 = vld [vmem:[%s0 + $0x7a] sm:$0xff]
  %v217 = vld [vmem:[%s0 + $0x82] sm:$0xff]
  %v218 = vld [vmem:[%s0 + $0x92] sm:$0xff]
  %v219 = vld [vmem:[%s0 + $0x9a] sm:$0xff]
  %v220 = vld [vmem:[%s0 + $0xaa] sm:$0xff]
  %v221 = vld [vmem:[%s0 + $0xb2] sm:$0xff]
  %v222 = vld [vmem:[%s0 + $0xc2] sm:$0xff]
  %v223 = vld [vmem:[%s0 + $0xca] sm:$0xff]
  %v224 = vld [vmem:[%s0 + $0xda] sm:$0xff]
  %v225 = vld [vmem:[%s0 + $0xe2] sm:$0xff]
  %v226 = vld [vmem:[%s0 + $0xf2] sm:$0xff]
  %v227 = vld [vmem:[%s0 + $0xfa] sm:$0xff]
  %v228 = vld [vmem:[%s0 + $0x10a] sm:$0xff]
  %v229 = vld [vmem:[%s0 + $0x112] sm:$0xff]
  %v230 = vld [vmem:[%s0 + $0x122] sm:$0xff]
  %v231 = vld [vmem:[%s0 + $0x12a] sm:$0xff]
  %v232 = vld [vmem:[%s0 + $0x13a] sm:$0xff]
  %v233 = vld [vmem:[%s0 + $0x142] sm:$0xff]
  %v234 = vld [vmem:[%s0 + $0x152] sm:$0xff]
  %v235 = vld [vmem:[%s0 + $0x15a] sm:$0xff]
  %v236 = vld [vmem:[%s0 + $0x16a] sm:$0xff]
  %v237 = vld [vmem:[%s0 + $0x172] sm:$0xff]
  %v238 = vld [vmem:[%s0 + $0x1b2] sm:$0xff]
  %v239 = vld [vmem:[%s0 + $0x1ba] sm:$0xff]
  %v240 = vld [vmem:[%s0 + $0x1ca] sm:$0xff]
  %v241 = vld [vmem:[%s0 + $0x1d2] sm:$0xff]
  %v242 = vld [vmem:[%s0 + $0x1e2] sm:$0xff]
  %v243 = vld [vmem:[%s0 + $0x1ea] sm:$0xff]
  %v244 = vld [vmem:[%s0 + $0x1fa] sm:$0xff]
  %v245 = vld [vmem:[%s0 + $0x202] sm:$0xff]
  %v246 = vld [vmem:[%s0 + $0x212] sm:$0xff]
  %v247 = vld [vmem:[%s0 + $0x21a] sm:$0xff]
  %v248 = vld [vmem:[%s0 + $0x22a] sm:$0xff]
  %v249 = vld [vmem:[%s0 + $0x232] sm:$0xff]
  %v250 = vld [vmem:[%s0 + $0x242] sm:$0xff]
  %v251 = vld [vmem:[%s0 + $0x24a] sm:$0xff]
  %v252 = vld [vmem:[%s0 + $0x25a] sm:$0xff]
  %v253 = vld [vmem:[%s0 + $0x262] sm:$0xff]
  %v254 = vld [vmem:[%s0 + $0x272] sm:$0xff]
  %v255 = vld [vmem:[%s0 + $0x27a] sm:$0xff]
  %v256 = vld [vmem:[%s0 + $0x28a] sm:$0xff]
  %v257 = vld [vmem:[%s0 + $0x292] sm:$0xff]
  %v258 = vld [vmem:[%s0 + $0x2a2] sm:$0xff]
  %v259 = vld [vmem:[%s0 + $0x2aa] sm:$0xff]
  %v260 = vld [vmem:[%s0 + $0x2ba] sm:$0xff]
  %v261 = vld [vmem:[%s0 + $0x2c2] sm:$0xff]
  %v262 = vld [vmem:[%s0 + $0x2d2] sm:$0xff]
  %v263 = vld [vmem:[%s0 + $0x2da] sm:$0xff]
  %v264 = vld [vmem:[%s0 + $0x2ea] sm:$0xff]
  %v265 = vld [vmem:[%s0 + $0x2f2] sm:$0xff]
  %v266 = vld [vmem:[%s0 + $0x302] sm:$0xff]
  %v267 = vld [vmem:[%s0 + $0x30a] sm:$0xff]
  %v268 = vld [vmem:[%s0 + $0x31a] sm:$0xff]
  %v269 = vld [vmem:[%s0 + $0x322] sm:$0xff]
  %v270 = vmax.f32 %v142, %v206
  %v271 = vmax.f32 %v143, %v207
  %v272 = vmax.f32 %v144, %v208
  %v273 = vmax.f32 %v145, %v209
  %v274 = vmax.f32 %v146, %v210
  %v275 = vmax.f32 %v147, %v211
  %v276 = vmax.f32 %v148, %v212
  %v277 = vmax.f32 %v149, %v213
  %v278 = vmax.f32 %v150, %v214
  %v279 = vmax.f32 %v151, %v215
  %v280 = vmax.f32 %v152, %v216
  %v281 = vmax.f32 %v153, %v217
  %v282 = vmax.f32 %v154, %v218
  %v283 = vmax.f32 %v155, %v219
  %v284 = vmax.f32 %v156, %v220
  %v285 = vmax.f32 %v157, %v221
  %v286 = vmax.f32 %v158, %v222
  %v287 = vmax.f32 %v159, %v223
  %v288 = vmax.f32 %v160, %v224
  %v289 = vmax.f32 %v161, %v225
  %v290 = vmax.f32 %v162, %v226
  %v291 = vmax.f32 %v163, %v227
  %v292 = vmax.f32 %v164, %v228
  %v293 = vmax.f32 %v165, %v229
  %v294 = vmax.f32 %v166, %v230
  %v295 = vmax.f32 %v167, %v231
  %v296 = vmax.f32 %v168, %v232
  %v297 = vmax.f32 %v169, %v233
  %v298 = vmax.f32 %v170, %v234
  %v299 = vmax.f32 %v171, %v235
  %v300 = vmax.f32 %v172, %v236
  %v301 = vmax.f32 %v173, %v237
  %v302 = vmax.f32 %v174, %v238
  %v303 = vmax.f32 %v175, %v239
  %v304 = vmax.f32 %v176, %v240
  %v305 = vmax.f32 %v177, %v241
  %v306 = vmax.f32 %v178, %v242
  %v307 = vmax.f32 %v179, %v243
  %v308 = vmax.f32 %v180, %v244
  %v309 = vmax.f32 %v181, %v245
  %v310 = vmax.f32 %v182, %v246
  %v311 = vmax.f32 %v183, %v247
  %v312 = vmax.f32 %v184, %v248
  %v313 = vmax.f32 %v185, %v249
  %v314 = vmax.f32 %v186, %v250
  %v315 = vmax.f32 %v187, %v251
  %v316 = vmax.f32 %v188, %v252
  %v317 = vmax.f32 %v189, %v253
  %v318 = vmax.f32 %v190, %v254
  %v319 = vmax.f32 %v191, %v255
  %v320 = vmax.f32 %v192, %v256
  %v321 = vmax.f32 %v193, %v257
  %v322 = vmax.f32 %v194, %v258
  %v323 = vmax.f32 %v195, %v259
  %v324 = vmax.f32 %v196, %v260
  %v325 = vmax.f32 %v197, %v261
  %v326 = vmax.f32 %v198, %v262
  %v327 = vmax.f32 %v199, %v263
  %v328 = vmax.f32 %v200, %v264
  %v329 = vmax.f32 %v201, %v265
  %v330 = vmax.f32 %v202, %v266
  %v331 = vmax.f32 %v203, %v267
  %v332 = vmax.f32 %v204, %v268
  %v333 = vmax.f32 %v205, %v269
  %s334 = scalar_lea.vmem %s0, 24
  %v335 = vld [vmem:[%s334] sm:$0xff]
  %v336 = vld [vmem:[%s334 + $0x8] sm:$0xff]
  %v337 = vld [vmem:[%s334 + $0x18] sm:$0xff]
  %v338 = vld [vmem:[%s334 + $0x20] sm:$0xff]
  %v339 = vld [vmem:[%s334 + $0x30] sm:$0xff]
  %v340 = vld [vmem:[%s334 + $0x38] sm:$0xff]
  %v341 = vld [vmem:[%s334 + $0x48] sm:$0xff]
  %v342 = vld [vmem:[%s334 + $0x50] sm:$0xff]
  %v343 = vld [vmem:[%s334 + $0x60] sm:$0xff]
  %v344 = vld [vmem:[%s334 + $0x68] sm:$0xff]
  %v345 = vld [vmem:[%s334 + $0x78] sm:$0xff]
  %v346 = vld [vmem:[%s334 + $0x80] sm:$0xff]
  %v347 = vld [vmem:[%s334 + $0x90] sm:$0xff]
  %v348 = vld [vmem:[%s334 + $0x98] sm:$0xff]
  %v349 = vld [vmem:[%s334 + $0xa8] sm:$0xff]
  %v350 = vld [vmem:[%s334 + $0xb0] sm:$0xff]
  %v351 = vld [vmem:[%s334 + $0xc0] sm:$0xff]
  %v352 = vld [vmem:[%s334 + $0xc8] sm:$0xff]
  %v353 = vld [vmem:[%s334 + $0xd8] sm:$0xff]
  %v354 = vld [vmem:[%s334 + $0xe0] sm:$0xff]
  %v355 = vld [vmem:[%s334 + $0xf0] sm:$0xff]
  %v356 = vld [vmem:[%s334 + $0xf8] sm:$0xff]
  %v357 = vld [vmem:[%s334 + $0x108] sm:$0xff]
  %v358 = vld [vmem:[%s334 + $0x110] sm:$0xff]
  %v359 = vld [vmem:[%s334 + $0x120] sm:$0xff]
  %v360 = vld [vmem:[%s334 + $0x128] sm:$0xff]
  %v361 = vld [vmem:[%s334 + $0x138] sm:$0xff]
  %v362 = vld [vmem:[%s334 + $0x140] sm:$0xff]
  %v363 = vld [vmem:[%s334 + $0x150] sm:$0xff]
  %v364 = vld [vmem:[%s334 + $0x158] sm:$0xff]
  %v365 = vld [vmem:[%s334 + $0x168] sm:$0xff]
  %v366 = vld [vmem:[%s334 + $0x170] sm:$0xff]
  %v367 = vld [vmem:[%s334 + $0x1b0] sm:$0xff]
  %v368 = vld [vmem:[%s334 + $0x1b8] sm:$0xff]
  %v369 = vld [vmem:[%s334 + $0x1c8] sm:$0xff]
  %v370 = vld [vmem:[%s334 + $0x1d0] sm:$0xff]
  %v371 = vld [vmem:[%s334 + $0x1e0] sm:$0xff]
  %v372 = vld [vmem:[%s334 + $0x1e8] sm:$0xff]
  %v373 = vld [vmem:[%s334 + $0x1f8] sm:$0xff]
  %v374 = vld [vmem:[%s334 + $0x200] sm:$0xff]
  %v375 = vld [vmem:[%s334 + $0x210] sm:$0xff]
  %v376 = vld [vmem:[%s334 + $0x218] sm:$0xff]
  %v377 = vld [vmem:[%s334 + $0x228] sm:$0xff]
  %v378 = vld [vmem:[%s334 + $0x230] sm:$0xff]
  %v379 = vld [vmem:[%s334 + $0x240] sm:$0xff]
  %v380 = vld [vmem:[%s334 + $0x248] sm:$0xff]
  %v381 = vld [vmem:[%s334 + $0x258] sm:$0xff]
  %v382 = vld [vmem:[%s334 + $0x260] sm:$0xff]
  %v383 = vld [vmem:[%s334 + $0x270] sm:$0xff]
  %v384 = vld [vmem:[%s334 + $0x278] sm:$0xff]
  %v385 = vld [vmem:[%s334 + $0x288] sm:$0xff]
  %v386 = vld [vmem:[%s334 + $0x290] sm:$0xff]
  %v387 = vld [vmem:[%s334 + $0x2a0] sm:$0xff]
  %v388 = vld [vmem:[%s334 + $0x2a8] sm:$0xff]
  %v389 = vld [vmem:[%s334 + $0x2b8] sm:$0xff]
  %v390 = vld [vmem:[%s334 + $0x2c0] sm:$0xff]
  %v391 = vld [vmem:[%s334 + $0x2d0] sm:$0xff]
  %v392 = vld [vmem:[%s334 + $0x2d8] sm:$0xff]
  %v393 = vld [vmem:[%s334 + $0x2e8] sm:$0xff]
  %v394 = vld [vmem:[%s334 + $0x2f0] sm:$0xff]
  %v395 = vld [vmem:[%s334 + $0x300] sm:$0xff]
  %v396 = vld [vmem:[%s334 + $0x308] sm:$0xff]
  %v397 = vld [vmem:[%s334 + $0x318] sm:$0xff]
  %v398 = vld [vmem:[%s334 + $0x320] sm:$0xff]
  %v399 = vmax.f32 %v270, %v335
  %v400 = vmax.f32 %v271, %v336
  %v401 = vmax.f32 %v272, %v337
  %v402 = vmax.f32 %v273, %v338
  %v403 = vmax.f32 %v274, %v339
  %v404 = vmax.f32 %v275, %v340
  %v405 = vmax.f32 %v276, %v341
  %v406 = vmax.f32 %v277, %v342
  %v407 = vmax.f32 %v278, %v343
  %v408 = vmax.f32 %v279, %v344
  %v409 = vmax.f32 %v280, %v345
  %v410 = vmax.f32 %v281, %v346
  %v411 = vmax.f32 %v282, %v347
  %v412 = vmax.f32 %v283, %v348
  %v413 = vmax.f32 %v284, %v349
  %v414 = vmax.f32 %v285, %v350
  %v415 = vmax.f32 %v286, %v351
  %v416 = vmax.f32 %v287, %v352
  %v417 = vmax.f32 %v288, %v353
  %v418 = vmax.f32 %v289, %v354
  %v419 = vmax.f32 %v290, %v355
  %v420 = vmax.f32 %v291, %v356
  %v421 = vmax.f32 %v292, %v357
  %v422 = vmax.f32 %v293, %v358
  %v423 = vmax.f32 %v294, %v359
  %v424 = vmax.f32 %v295, %v360
  %v425 = vmax.f32 %v296, %v361
  %v426 = vmax.f32 %v297, %v362
  %v427 = vmax.f32 %v298, %v363
  %v428 = vmax.f32 %v299, %v364
  %v429 = vmax.f32 %v300, %v365
  %v430 = vmax.f32 %v301, %v366
  %v431 = vmax.f32 %v302, %v367
  %v432 = vmax.f32 %v303, %v368
  %v433 = vmax.f32 %v304, %v369
  %v434 = vmax.f32 %v305, %v370
  %v435 = vmax.f32 %v306, %v371
  %v436 = vmax.f32 %v307, %v372
  %v437 = vmax.f32 %v308, %v373
  %v438 = vmax.f32 %v309, %v374
  %v439 = vmax.f32 %v310, %v375
  %v440 = vmax.f32 %v311, %v376
  %v441 = vmax.f32 %v312, %v377
  %v442 = vmax.f32 %v313, %v378
  %v443 = vmax.f32 %v314, %v379
  %v444 = vmax.f32 %v315, %v380
  %v445 = vmax.f32 %v316, %v381
  %v446 = vmax.f32 %v317, %v382
  %v447 = vmax.f32 %v318, %v383
  %v448 = vmax.f32 %v319, %v384
  %v449 = vmax.f32 %v320, %v385
  %v450 = vmax.f32 %v321, %v386
  %v451 = vmax.f32 %v322, %v387
  %v452 = vmax.f32 %v323, %v388
  %v453 = vmax.f32 %v324, %v389
  %v454 = vmax.f32 %v325, %v390
  %v455 = vmax.f32 %v326, %v391
  %v456 = vmax.f32 %v327, %v392
  %v457 = vmax.f32 %v328, %v393
  %v458 = vmax.f32 %v329, %v394
  %v459 = vmax.f32 %v330, %v395
  %v460 = vmax.f32 %v331, %v396
  %v461 = vmax.f32 %v332, %v397
  %v462 = vmax.f32 %v333, %v398
  %v463 = vld [vmem:[%s334 + $0x1] sm:$0xff]
  %v464 = vld [vmem:[%s334 + $0x9] sm:$0xff]
  %v465 = vld [vmem:[%s334 + $0x19] sm:$0xff]
  %v466 = vld [vmem:[%s334 + $0x21] sm:$0xff]
  %v467 = vld [vmem:[%s334 + $0x31] sm:$0xff]
  %v468 = vld [vmem:[%s334 + $0x39] sm:$0xff]
  %v469 = vld [vmem:[%s334 + $0x49] sm:$0xff]
  %v470 = vld [vmem:[%s334 + $0x51] sm:$0xff]
  %v471 = vld [vmem:[%s334 + $0x61] sm:$0xff]
  %v472 = vld [vmem:[%s334 + $0x69] sm:$0xff]
  %v473 = vld [vmem:[%s334 + $0x79] sm:$0xff]
  %v474 = vld [vmem:[%s334 + $0x81] sm:$0xff]
  %v475 = vld [vmem:[%s334 + $0x91] sm:$0xff]
  %v476 = vld [vmem:[%s334 + $0x99] sm:$0xff]
  %v477 = vld [vmem:[%s334 + $0xa9] sm:$0xff]
  %v478 = vld [vmem:[%s334 + $0xb1] sm:$0xff]
  %v479 = vld [vmem:[%s334 + $0xc1] sm:$0xff]
  %v480 = vld [vmem:[%s334 + $0xc9] sm:$0xff]
  %v481 = vld [vmem:[%s334 + $0xd9] sm:$0xff]
  %v482 = vld [vmem:[%s334 + $0xe1] sm:$0xff]
  %v483 = vld [vmem:[%s334 + $0xf1] sm:$0xff]
  %v484 = vld [vmem:[%s334 + $0xf9] sm:$0xff]
  %v485 = vld [vmem:[%s334 + $0x109] sm:$0xff]
  %v486 = vld [vmem:[%s334 + $0x111] sm:$0xff]
  %v487 = vld [vmem:[%s334 + $0x121] sm:$0xff]
  %v488 = vld [vmem:[%s334 + $0x129] sm:$0xff]
  %v489 = vld [vmem:[%s334 + $0x139] sm:$0xff]
  %v490 = vld [vmem:[%s334 + $0x141] sm:$0xff]
  %v491 = vld [vmem:[%s334 + $0x151] sm:$0xff]
  %v492 = vld [vmem:[%s334 + $0x159] sm:$0xff]
  %v493 = vld [vmem:[%s334 + $0x169] sm:$0xff]
  %v494 = vld [vmem:[%s334 + $0x171] sm:$0xff]
  %v495 = vld [vmem:[%s334 + $0x1b1] sm:$0xff]
  %v496 = vld [vmem:[%s334 + $0x1b9] sm:$0xff]
  %v497 = vld [vmem:[%s334 + $0x1c9] sm:$0xff]
  %v498 = vld [vmem:[%s334 + $0x1d1] sm:$0xff]
  %v499 = vld [vmem:[%s334 + $0x1e1] sm:$0xff]
  %v500 = vld [vmem:[%s334 + $0x1e9] sm:$0xff]
  %v501 = vld [vmem:[%s334 + $0x1f9] sm:$0xff]
  %v502 = vld [vmem:[%s334 + $0x201] sm:$0xff]
  %v503 = vld [vmem:[%s334 + $0x211] sm:$0xff]
  %v504 = vld [vmem:[%s334 + $0x219] sm:$0xff]
  %v505 = vld [vmem:[%s334 + $0x229] sm:$0xff]
  %v506 = vld [vmem:[%s334 + $0x231] sm:$0xff]
  %v507 = vld [vmem:[%s334 + $0x241] sm:$0xff]
  %v508 = vld [vmem:[%s334 + $0x249] sm:$0xff]
  %v509 = vld [vmem:[%s334 + $0x259] sm:$0xff]
  %v510 = vld [vmem:[%s334 + $0x261] sm:$0xff]
  %v511 = vld [vmem:[%s334 + $0x271] sm:$0xff]
  %v512 = vld [vmem:[%s334 + $0x279] sm:$0xff]
  %v513 = vld [vmem:[%s334 + $0x289] sm:$0xff]
  %v514 = vld [vmem:[%s334 + $0x291] sm:$0xff]
  %v515 = vld [vmem:[%s334 + $0x2a1] sm:$0xff]
  %v516 = vld [vmem:[%s334 + $0x2a9] sm:$0xff]
  %v517 = vld [vmem:[%s334 + $0x2b9] sm:$0xff]
  %v518 = vld [vmem:[%s334 + $0x2c1] sm:$0xff]
  %v519 = vld [vmem:[%s334 + $0x2d1] sm:$0xff]
  %v520 = vld [vmem:[%s334 + $0x2d9] sm:$0xff]
  %v521 = vld [vmem:[%s334 + $0x2e9] sm:$0xff]
  %v522 = vld [vmem:[%s334 + $0x2f1] sm:$0xff]
  %v523 = vld [vmem:[%s334 + $0x301] sm:$0xff]
  %v524 = vld [vmem:[%s334 + $0x309] sm:$0xff]
  %v525 = vld [vmem:[%s334 + $0x319] sm:$0xff]
  %v526 = vld [vmem:[%s334 + $0x321] sm:$0xff]
  %v527 = vmax.f32 %v399, %v463
  %v528 = vmax.f32 %v400, %v464
  %v529 = vmax.f32 %v401, %v465
  %v530 = vmax.f32 %v402, %v466
  %v531 = vmax.f32 %v403, %v467
  %v532 = vmax.f32 %v404, %v468
  %v533 = vmax.f32 %v405, %v469
  %v534 = vmax.f32 %v406, %v470
  %v535 = vmax.f32 %v407, %v471
  %v536 = vmax.f32 %v408, %v472
  %v537 = vmax.f32 %v409, %v473
  %v538 = vmax.f32 %v410, %v474
  %v539 = vmax.f32 %v411, %v475
  %v540 = vmax.f32 %v412, %v476
  %v541 = vmax.f32 %v413, %v477
  %v542 = vmax.f32 %v414, %v478
  %v543 = vmax.f32 %v415, %v479
  %v544 = vmax.f32 %v416, %v480
  %v545 = vmax.f32 %v417, %v481
  %v546 = vmax.f32 %v418, %v482
  %v547 = vmax.f32 %v419, %v483
  %v548 = vmax.f32 %v420, %v484
  %v549 = vmax.f32 %v421, %v485
  %v550 = vmax.f32 %v422, %v486
  %v551 = vmax.f32 %v423, %v487
  %v552 = vmax.f32 %v424, %v488
  %v553 = vmax.f32 %v425, %v489
  %v554 = vmax.f32 %v426, %v490
  %v555 = vmax.f32 %v427, %v491
  %v556 = vmax.f32 %v428, %v492
  %v557 = vmax.f32 %v429, %v493
  %v558 = vmax.f32 %v430, %v494
  %v559 = vmax.f32 %v431, %v495
  %v560 = vmax.f32 %v432, %v496
  %v561 = vmax.f32 %v433, %v497
  %v562 = vmax.f32 %v434, %v498
  %v563 = vmax.f32 %v435, %v499
  %v564 = vmax.f32 %v436, %v500
  %v565 = vmax.f32 %v437, %v501
  %v566 = vmax.f32 %v438, %v502
  %v567 = vmax.f32 %v439, %v503
  %v568 = vmax.f32 %v440, %v504
  %v569 = vmax.f32 %v441, %v505
  %v570 = vmax.f32 %v442, %v506
  %v571 = vmax.f32 %v443, %v507
  %v572 = vmax.f32 %v444, %v508
  %v573 = vmax.f32 %v445, %v509
  %v574 = vmax.f32 %v446, %v510
  %v575 = vmax.f32 %v447, %v511
  %v576 = vmax.f32 %v448, %v512
  %v577 = vmax.f32 %v449, %v513
  %v578 = vmax.f32 %v450, %v514
  %v579 = vmax.f32 %v451, %v515
  %v580 = vmax.f32 %v452, %v516
  %v581 = vmax.f32 %v453, %v517
  %v582 = vmax.f32 %v454, %v518
  %v583 = vmax.f32 %v455, %v519
  %v584 = vmax.f32 %v456, %v520
  %v585 = vmax.f32 %v457, %v521
  %v586 = vmax.f32 %v458, %v522
  %v587 = vmax.f32 %v459, %v523
  %v588 = vmax.f32 %v460, %v524
  %v589 = vmax.f32 %v461, %v525
  %v590 = vmax.f32 %v462, %v526
  %v591 = vld [vmem:[%s334 + $0x2] sm:$0xff]
  %v592 = vld [vmem:[%s334 + $0xa] sm:$0xff]
  %v593 = vld [vmem:[%s334 + $0x1a] sm:$0xff]
  %v594 = vld [vmem:[%s334 + $0x22] sm:$0xff]
  %v595 = vld [vmem:[%s334 + $0x32] sm:$0xff]
  %v596 = vld [vmem:[%s334 + $0x3a] sm:$0xff]
  %v597 = vld [vmem:[%s334 + $0x4a] sm:$0xff]
  %v598 = vld [vmem:[%s334 + $0x52] sm:$0xff]
  %v599 = vld [vmem:[%s334 + $0x62] sm:$0xff]
  %v600 = vld [vmem:[%s334 + $0x6a] sm:$0xff]
  %v601 = vld [vmem:[%s334 + $0x7a] sm:$0xff]
  %v602 = vld [vmem:[%s334 + $0x82] sm:$0xff]
  %v603 = vld [vmem:[%s334 + $0x92] sm:$0xff]
  %v604 = vld [vmem:[%s334 + $0x9a] sm:$0xff]
  %v605 = vld [vmem:[%s334 + $0xaa] sm:$0xff]
  %v606 = vld [vmem:[%s334 + $0xb2] sm:$0xff]
  %v607 = vld [vmem:[%s334 + $0xc2] sm:$0xff]
  %v608 = vld [vmem:[%s334 + $0xca] sm:$0xff]
  %v609 = vld [vmem:[%s334 + $0xda] sm:$0xff]
  %v610 = vld [vmem:[%s334 + $0xe2] sm:$0xff]
  %v611 = vld [vmem:[%s334 + $0xf2] sm:$0xff]
  %v612 = vld [vmem:[%s334 + $0xfa] sm:$0xff]
  %v613 = vld [vmem:[%s334 + $0x10a] sm:$0xff]
  %v614 = vld [vmem:[%s334 + $0x112] sm:$0xff]
  %v615 = vld [vmem:[%s334 + $0x122] sm:$0xff]
  %v616 = vld [vmem:[%s334 + $0x12a] sm:$0xff]
  %v617 = vld [vmem:[%s334 + $0x13a] sm:$0xff]
  %v618 = vld [vmem:[%s334 + $0x142] sm:$0xff]
  %v619 = vld [vmem:[%s334 + $0x152] sm:$0xff]
  %v620 = vld [vmem:[%s334 + $0x15a] sm:$0xff]
  %v621 = vld [vmem:[%s334 + $0x16a] sm:$0xff]
  %v622 = vld [vmem:[%s334 + $0x172] sm:$0xff]
  %v623 = vld [vmem:[%s334 + $0x1b2] sm:$0xff]
  %v624 = vld [vmem:[%s334 + $0x1ba] sm:$0xff]
  %v625 = vld [vmem:[%s334 + $0x1ca] sm:$0xff]
  %v626 = vld [vmem:[%s334 + $0x1d2] sm:$0xff]
  %v627 = vld [vmem:[%s334 + $0x1e2] sm:$0xff]
  %v628 = vld [vmem:[%s334 + $0x1ea] sm:$0xff]
  %v629 = vld [vmem:[%s334 + $0x1fa] sm:$0xff]
  %v630 = vld [vmem:[%s334 + $0x202] sm:$0xff]
  %v631 = vld [vmem:[%s334 + $0x212] sm:$0xff]
  %v632 = vld [vmem:[%s334 + $0x21a] sm:$0xff]
  %v633 = vld [vmem:[%s334 + $0x22a] sm:$0xff]
  %v634 = vld [vmem:[%s334 + $0x232] sm:$0xff]
  %v635 = vld [vmem:[%s334 + $0x242] sm:$0xff]
  %v636 = vld [vmem:[%s334 + $0x24a] sm:$0xff]
  %v637 = vld [vmem:[%s334 + $0x25a] sm:$0xff]
  %v638 = vld [vmem:[%s334 + $0x262] sm:$0xff]
  %v639 = vld [vmem:[%s334 + $0x272] sm:$0xff]
  %v640 = vld [vmem:[%s334 + $0x27a] sm:$0xff]
  %v641 = vld [vmem:[%s334 + $0x28a] sm:$0xff]
  %v642 = vld [vmem:[%s334 + $0x292] sm:$0xff]
  %v643 = vld [vmem:[%s334 + $0x2a2] sm:$0xff]
  %v644 = vld [vmem:[%s334 + $0x2aa] sm:$0xff]
  %v645 = vld [vmem:[%s334 + $0x2ba] sm:$0xff]
  %v646 = vld [vmem:[%s334 + $0x2c2] sm:$0xff]
  %v647 = vld [vmem:[%s334 + $0x2d2] sm:$0xff]
  %v648 = vld [vmem:[%s334 + $0x2da] sm:$0xff]
  %v649 = vld [vmem:[%s334 + $0x2ea] sm:$0xff]
  %v650 = vld [vmem:[%s334 + $0x2f2] sm:$0xff]
  %v651 = vld [vmem:[%s334 + $0x302] sm:$0xff]
  %v652 = vld [vmem:[%s334 + $0x30a] sm:$0xff]
  %v653 = vld [vmem:[%s334 + $0x31a] sm:$0xff]
  %v654 = vld [vmem:[%s334 + $0x322] sm:$0xff]
  %v655 = vmax.f32 %v527, %v591
  %v656 = vmax.f32 %v528, %v592
  %v657 = vmax.f32 %v529, %v593
  %v658 = vmax.f32 %v530, %v594
  %v659 = vmax.f32 %v531, %v595
  %v660 = vmax.f32 %v532, %v596
  %v661 = vmax.f32 %v533, %v597
  %v662 = vmax.f32 %v534, %v598
  %v663 = vmax.f32 %v535, %v599
  %v664 = vmax.f32 %v536, %v600
  %v665 = vmax.f32 %v537, %v601
  %v666 = vmax.f32 %v538, %v602
  %v667 = vmax.f32 %v539, %v603
  %v668 = vmax.f32 %v540, %v604
  %v669 = vmax.f32 %v541, %v605
  %v670 = vmax.f32 %v542, %v606
  %v671 = vmax.f32 %v543, %v607
  %v672 = vmax.f32 %v544, %v608
  %v673 = vmax.f32 %v545, %v609
  %v674 = vmax.f32 %v546, %v610
  %v675 = vmax.f32 %v547, %v611
  %v676 = vmax.f32 %v548, %v612
  %v677 = vmax.f32 %v549, %v613
  %v678 = vmax.f32 %v550, %v614
  %v679 = vmax.f32 %v551, %v615
  %v680 = vmax.f32 %v552, %v616
  %v681 = vmax.f32 %v553, %v617
  %v682 = vmax.f32 %v554, %v618
  %v683 = vmax.f32 %v555, %v619
  %v684 = vmax.f32 %v556, %v620
  %v685 = vmax.f32 %v557, %v621
  %v686 = vmax.f32 %v558, %v622
  %v687 = vmax.f32 %v559, %v623
  %v688 = vmax.f32 %v560, %v624
  %v689 = vmax.f32 %v561, %v625
  %v690 = vmax.f32 %v562, %v626
  %v691 = vmax.f32 %v563, %v627
  %v692 = vmax.f32 %v564, %v628
  %v693 = vmax.f32 %v565, %v629
  %v694 = vmax.f32 %v566, %v630
  %v695 = vmax.f32 %v567, %v631
  %v696 = vmax.f32 %v568, %v632
  %v697 = vmax.f32 %v569, %v633
  %v698 = vmax.f32 %v570, %v634
  %v699 = vmax.f32 %v571, %v635
  %v700 = vmax.f32 %v572, %v636
  %v701 = vmax.f32 %v573, %v637
  %v702 = vmax.f32 %v574, %v638
  %v703 = vmax.f32 %v575, %v639
  %v704 = vmax.f32 %v576, %v640
  %v705 = vmax.f32 %v577, %v641
  %v706 = vmax.f32 %v578, %v642
  %v707 = vmax.f32 %v579, %v643
  %v708 = vmax.f32 %v580, %v644
  %v709 = vmax.f32 %v581, %v645
  %v710 = vmax.f32 %v582, %v646
  %v711 = vmax.f32 %v583, %v647
  %v712 = vmax.f32 %v584, %v648
  %v713 = vmax.f32 %v585, %v649
  %v714 = vmax.f32 %v586, %v650
  %v715 = vmax.f32 %v587, %v651
  %v716 = vmax.f32 %v588, %v652
  %v717 = vmax.f32 %v589, %v653
  %v718 = vmax.f32 %v590, %v654
  %s719 = scalar_lea.vmem %s0, 48
  %v720 = vld [vmem:[%s719] sm:$0xff]
  %v721 = vld [vmem:[%s719 + $0x8] sm:$0xff]
  %v722 = vld [vmem:[%s719 + $0x18] sm:$0xff]
  %v723 = vld [vmem:[%s719 + $0x20] sm:$0xff]
  %v724 = vld [vmem:[%s719 + $0x30] sm:$0xff]
  %v725 = vld [vmem:[%s719 + $0x38] sm:$0xff]
  %v726 = vld [vmem:[%s719 + $0x48] sm:$0xff]
  %v727 = vld [vmem:[%s719 + $0x50] sm:$0xff]
  %v728 = vld [vmem:[%s719 + $0x60] sm:$0xff]
  %v729 = vld [vmem:[%s719 + $0x68] sm:$0xff]
  %v730 = vld [vmem:[%s719 + $0x78] sm:$0xff]
  %v731 = vld [vmem:[%s719 + $0x80] sm:$0xff]
  %v732 = vld [vmem:[%s719 + $0x90] sm:$0xff]
  %v733 = vld [vmem:[%s719 + $0x98] sm:$0xff]
  %v734 = vld [vmem:[%s719 + $0xa8] sm:$0xff]
  %v735 = vld [vmem:[%s719 + $0xb0] sm:$0xff]
  %v736 = vld [vmem:[%s719 + $0xc0] sm:$0xff]
  %v737 = vld [vmem:[%s719 + $0xc8] sm:$0xff]
  %v738 = vld [vmem:[%s719 + $0xd8] sm:$0xff]
  %v739 = vld [vmem:[%s719 + $0xe0] sm:$0xff]
  %v740 = vld [vmem:[%s719 + $0xf0] sm:$0xff]
  %v741 = vld [vmem:[%s719 + $0xf8] sm:$0xff]
  %v742 = vld [vmem:[%s719 + $0x108] sm:$0xff]
  %v743 = vld [vmem:[%s719 + $0x110] sm:$0xff]
  %v744 = vld [vmem:[%s719 + $0x120] sm:$0xff]
  %v745 = vld [vmem:[%s719 + $0x128] sm:$0xff]
  %v746 = vld [vmem:[%s719 + $0x138] sm:$0xff]
  %v747 = vld [vmem:[%s719 + $0x140] sm:$0xff]
  %v748 = vld [vmem:[%s719 + $0x150] sm:$0xff]
  %v749 = vld [vmem:[%s719 + $0x158] sm:$0xff]
  %v750 = vld [vmem:[%s719 + $0x168] sm:$0xff]
  %v751 = vld [vmem:[%s719 + $0x170] sm:$0xff]
  %v752 = vld [vmem:[%s719 + $0x1b0] sm:$0xff]
  %v753 = vld [vmem:[%s719 + $0x1b8] sm:$0xff]
  %v754 = vld [vmem:[%s719 + $0x1c8] sm:$0xff]
  %v755 = vld [vmem:[%s719 + $0x1d0] sm:$0xff]
  %v756 = vld [vmem:[%s719 + $0x1e0] sm:$0xff]
  %v757 = vld [vmem:[%s719 + $0x1e8] sm:$0xff]
  %v758 = vld [vmem:[%s719 + $0x1f8] sm:$0xff]
  %v759 = vld [vmem:[%s719 + $0x200] sm:$0xff]
  %v760 = vld [vmem:[%s719 + $0x210] sm:$0xff]
  %v761 = vld [vmem:[%s719 + $0x218] sm:$0xff]
  %v762 = vld [vmem:[%s719 + $0x228] sm:$0xff]
  %v763 = vld [vmem:[%s719 + $0x230] sm:$0xff]
  %v764 = vld [vmem:[%s719 + $0x240] sm:$0xff]
  %v765 = vld [vmem:[%s719 + $0x248] sm:$0xff]
  %v766 = vld [vmem:[%s719 + $0x258] sm:$0xff]
  %v767 = vld [vmem:[%s719 + $0x260] sm:$0xff]
  %v768 = vld [vmem:[%s719 + $0x270] sm:$0xff]
  %v769 = vld [vmem:[%s719 + $0x278] sm:$0xff]
  %v770 = vld [vmem:[%s719 + $0x288] sm:$0xff]
  %v771 = vld [vmem:[%s719 + $0x290] sm:$0xff]
  %v772 = vld [vmem:[%s719 + $0x2a0] sm:$0xff]
  %v773 = vld [vmem:[%s719 + $0x2a8] sm:$0xff]
  %v774 = vld [vmem:[%s719 + $0x2b8] sm:$0xff]
  %v775 = vld [vmem:[%s719 + $0x2c0] sm:$0xff]
  %v776 = vld [vmem:[%s719 + $0x2d0] sm:$0xff]
  %v777 = vld [vmem:[%s719 + $0x2d8] sm:$0xff]
  %v778 = vld [vmem:[%s719 + $0x2e8] sm:$0xff]
  %v779 = vld [vmem:[%s719 + $0x2f0] sm:$0xff]
  %v780 = vld [vmem:[%s719 + $0x300] sm:$0xff]
  %v781 = vld [vmem:[%s719 + $0x308] sm:$0xff]
  %v782 = vld [vmem:[%s719 + $0x318] sm:$0xff]
  %v783 = vld [vmem:[%s719 + $0x320] sm:$0xff]
  %v784 = vmax.f32 %v655, %v720
  %v785 = vmax.f32 %v656, %v721
  %v786 = vmax.f32 %v657, %v722
  %v787 = vmax.f32 %v658, %v723
  %v788 = vmax.f32 %v659, %v724
  %v789 = vmax.f32 %v660, %v725
  %v790 = vmax.f32 %v661, %v726
  %v791 = vmax.f32 %v662, %v727
  %v792 = vmax.f32 %v663, %v728
  %v793 = vmax.f32 %v664, %v729
  %v794 = vmax.f32 %v665, %v730
  %v795 = vmax.f32 %v666, %v731
  %v796 = vmax.f32 %v667, %v732
  %v797 = vmax.f32 %v668, %v733
  %v798 = vmax.f32 %v669, %v734
  %v799 = vmax.f32 %v670, %v735
  %v800 = vmax.f32 %v671, %v736
  %v801 = vmax.f32 %v672, %v737
  %v802 = vmax.f32 %v673, %v738
  %v803 = vmax.f32 %v674, %v739
  %v804 = vmax.f32 %v675, %v740
  %v805 = vmax.f32 %v676, %v741
  %v806 = vmax.f32 %v677, %v742
  %v807 = vmax.f32 %v678, %v743
  %v808 = vmax.f32 %v679, %v744
  %v809 = vmax.f32 %v680, %v745
  %v810 = vmax.f32 %v681, %v746
  %v811 = vmax.f32 %v682, %v747
  %v812 = vmax.f32 %v683, %v748
  %v813 = vmax.f32 %v684, %v749
  %v814 = vmax.f32 %v685, %v750
  %v815 = vmax.f32 %v686, %v751
  %v816 = vmax.f32 %v687, %v752
  %v817 = vmax.f32 %v688, %v753
  %v818 = vmax.f32 %v689, %v754
  %v819 = vmax.f32 %v690, %v755
  %v820 = vmax.f32 %v691, %v756
  %v821 = vmax.f32 %v692, %v757
  %v822 = vmax.f32 %v693, %v758
  %v823 = vmax.f32 %v694, %v759
  %v824 = vmax.f32 %v695, %v760
  %v825 = vmax.f32 %v696, %v761
  %v826 = vmax.f32 %v697, %v762
  %v827 = vmax.f32 %v698, %v763
  %v828 = vmax.f32 %v699, %v764
  %v829 = vmax.f32 %v700, %v765
  %v830 = vmax.f32 %v701, %v766
  %v831 = vmax.f32 %v702, %v767
  %v832 = vmax.f32 %v703, %v768
  %v833 = vmax.f32 %v704, %v769
  %v834 = vmax.f32 %v705, %v770
  %v835 = vmax.f32 %v706, %v771
  %v836 = vmax.f32 %v707, %v772
  %v837 = vmax.f32 %v708, %v773
  %v838 = vmax.f32 %v709, %v774
  %v839 = vmax.f32 %v710, %v775
  %v840 = vmax.f32 %v711, %v776
  %v841 = vmax.f32 %v712, %v777
  %v842 = vmax.f32 %v713, %v778
  %v843 = vmax.f32 %v714, %v779
  %v844 = vmax.f32 %v715, %v780
  %v845 = vmax.f32 %v716, %v781
  %v846 = vmax.f32 %v717, %v782
  %v847 = vmax.f32 %v718, %v783
  %v848 = vld [vmem:[%s719 + $0x1] sm:$0xff]
  %v849 = vld [vmem:[%s719 + $0x9] sm:$0xff]
  %v850 = vld [vmem:[%s719 + $0x19] sm:$0xff]
  %v851 = vld [vmem:[%s719 + $0x21] sm:$0xff]
  %v852 = vld [vmem:[%s719 + $0x31] sm:$0xff]
  %v853 = vld [vmem:[%s719 + $0x39] sm:$0xff]
  %v854 = vld [vmem:[%s719 + $0x49] sm:$0xff]
  %v855 = vld [vmem:[%s719 + $0x51] sm:$0xff]
  %v856 = vld [vmem:[%s719 + $0x61] sm:$0xff]
  %v857 = vld [vmem:[%s719 + $0x69] sm:$0xff]
  %v858 = vld [vmem:[%s719 + $0x79] sm:$0xff]
  %v859 = vld [vmem:[%s719 + $0x81] sm:$0xff]
  %v860 = vld [vmem:[%s719 + $0x91] sm:$0xff]
  %v861 = vld [vmem:[%s719 + $0x99] sm:$0xff]
  %v862 = vld [vmem:[%s719 + $0xa9] sm:$0xff]
  %v863 = vld [vmem:[%s719 + $0xb1] sm:$0xff]
  %v864 = vld [vmem:[%s719 + $0xc1] sm:$0xff]
  %v865 = vld [vmem:[%s719 + $0xc9] sm:$0xff]
  %v866 = vld [vmem:[%s719 + $0xd9] sm:$0xff]
  %v867 = vld [vmem:[%s719 + $0xe1] sm:$0xff]
  %v868 = vld [vmem:[%s719 + $0xf1] sm:$0xff]
  %v869 = vld [vmem:[%s719 + $0xf9] sm:$0xff]
  %v870 = vld [vmem:[%s719 + $0x109] sm:$0xff]
  %v871 = vld [vmem:[%s719 + $0x111] sm:$0xff]
  %v872 = vld [vmem:[%s719 + $0x121] sm:$0xff]
  %v873 = vld [vmem:[%s719 + $0x129] sm:$0xff]
  %v874 = vld [vmem:[%s719 + $0x139] sm:$0xff]
  %v875 = vld [vmem:[%s719 + $0x141] sm:$0xff]
  %v876 = vld [vmem:[%s719 + $0x151] sm:$0xff]
  %v877 = vld [vmem:[%s719 + $0x159] sm:$0xff]
  %v878 = vld [vmem:[%s719 + $0x169] sm:$0xff]
  %v879 = vld [vmem:[%s719 + $0x171] sm:$0xff]
  %v880 = vld [vmem:[%s719 + $0x1b1] sm:$0xff]
  %v881 = vld [vmem:[%s719 + $0x1b9] sm:$0xff]
  %v882 = vld [vmem:[%s719 + $0x1c9] sm:$0xff]
  %v883 = vld [vmem:[%s719 + $0x1d1] sm:$0xff]
  %v884 = vld [vmem:[%s719 + $0x1e1] sm:$0xff]
  %v885 = vld [vmem:[%s719 + $0x1e9] sm:$0xff]
  %v886 = vld [vmem:[%s719 + $0x1f9] sm:$0xff]
  %v887 = vld [vmem:[%s719 + $0x201] sm:$0xff]
  %v888 = vld [vmem:[%s719 + $0x211] sm:$0xff]
  %v889 = vld [vmem:[%s719 + $0x219] sm:$0xff]
  %v890 = vld [vmem:[%s719 + $0x229] sm:$0xff]
  %v891 = vld [vmem:[%s719 + $0x231] sm:$0xff]
  %v892 = vld [vmem:[%s719 + $0x241] sm:$0xff]
  %v893 = vld [vmem:[%s719 + $0x249] sm:$0xff]
  %v894 = vld [vmem:[%s719 + $0x259] sm:$0xff]
  %v895 = vld [vmem:[%s719 + $0x261] sm:$0xff]
  %v896 = vld [vmem:[%s719 + $0x271] sm:$0xff]
  %v897 = vld [vmem:[%s719 + $0x279] sm:$0xff]
  %v898 = vld [vmem:[%s719 + $0x289] sm:$0xff]
  %v899 = vld [vmem:[%s719 + $0x291] sm:$0xff]
  %v900 = vld [vmem:[%s719 + $0x2a1] sm:$0xff]
  %v901 = vld [vmem:[%s719 + $0x2a9] sm:$0xff]
  %v902 = vld [vmem:[%s719 + $0x2b9] sm:$0xff]
  %v903 = vld [vmem:[%s719 + $0x2c1] sm:$0xff]
  %v904 = vld [vmem:[%s719 + $0x2d1] sm:$0xff]
  %v905 = vld [vmem:[%s719 + $0x2d9] sm:$0xff]
  %v906 = vld [vmem:[%s719 + $0x2e9] sm:$0xff]
  %v907 = vld [vmem:[%s719 + $0x2f1] sm:$0xff]
  %v908 = vld [vmem:[%s719 + $0x301] sm:$0xff]
  %v909 = vld [vmem:[%s719 + $0x309] sm:$0xff]
  %v910 = vld [vmem:[%s719 + $0x319] sm:$0xff]
  %v911 = vld [vmem:[%s719 + $0x321] sm:$0xff]
  %v912 = vmax.f32 %v784, %v848
  %v913 = vmax.f32 %v785, %v849
  %v914 = vmax.f32 %v786, %v850
  %v915 = vmax.f32 %v787, %v851
  %v916 = vmax.f32 %v788, %v852
  %v917 = vmax.f32 %v789, %v853
  %v918 = vmax.f32 %v790, %v854
  %v919 = vmax.f32 %v791, %v855
  %v920 = vmax.f32 %v792, %v856
  %v921 = vmax.f32 %v793, %v857
  %v922 = vmax.f32 %v794, %v858
  %v923 = vmax.f32 %v795, %v859
  %v924 = vmax.f32 %v796, %v860
  %v925 = vmax.f32 %v797, %v861
  %v926 = vmax.f32 %v798, %v862
  %v927 = vmax.f32 %v799, %v863
  %v928 = vmax.f32 %v800, %v864
  %v929 = vmax.f32 %v801, %v865
  %v930 = vmax.f32 %v802, %v866
  %v931 = vmax.f32 %v803, %v867
  %v932 = vmax.f32 %v804, %v868
  %v933 = vmax.f32 %v805, %v869
  %v934 = vmax.f32 %v806, %v870
  %v935 = vmax.f32 %v807, %v871
  %v936 = vmax.f32 %v808, %v872
  %v937 = vmax.f32 %v809, %v873
  %v938 = vmax.f32 %v810, %v874
  %v939 = vmax.f32 %v811, %v875
  %v940 = vmax.f32 %v812, %v876
  %v941 = vmax.f32 %v813, %v877
  %v942 = vmax.f32 %v814, %v878
  %v943 = vmax.f32 %v815, %v879
  %v944 = vmax.f32 %v816, %v880
  %v945 = vmax.f32 %v817, %v881
  %v946 = vmax.f32 %v818, %v882
  %v947 = vmax.f32 %v819, %v883
  %v948 = vmax.f32 %v820, %v884
  %v949 = vmax.f32 %v821, %v885
  %v950 = vmax.f32 %v822, %v886
  %v951 = vmax.f32 %v823, %v887
  %v952 = vmax.f32 %v824, %v888
  %v953 = vmax.f32 %v825, %v889
  %v954 = vmax.f32 %v826, %v890
  %v955 = vmax.f32 %v827, %v891
  %v956 = vmax.f32 %v828, %v892
  %v957 = vmax.f32 %v829, %v893
  %v958 = vmax.f32 %v830, %v894
  %v959 = vmax.f32 %v831, %v895
  %v960 = vmax.f32 %v832, %v896
  %v961 = vmax.f32 %v833, %v897
  %v962 = vmax.f32 %v834, %v898
  %v963 = vmax.f32 %v835, %v899
  %v964 = vmax.f32 %v836, %v900
  %v965 = vmax.f32 %v837, %v901
  %v966 = vmax.f32 %v838, %v902
  %v967 = vmax.f32 %v839, %v903
  %v968 = vmax.f32 %v840, %v904
  %v969 = vmax.f32 %v841, %v905
  %v970 = vmax.f32 %v842, %v906
  %v971 = vmax.f32 %v843, %v907
  %v972 = vmax.f32 %v844, %v908
  %v973 = vmax.f32 %v845, %v909
  %v974 = vmax.f32 %v846, %v910
  %v975 = vmax.f32 %v847, %v911
  %v976 = vld [vmem:[%s719 + $0x2] sm:$0xff]
  %v977 = vld [vmem:[%s719 + $0xa] sm:$0xff]
  %v978 = vld [vmem:[%s719 + $0x1a] sm:$0xff]
  %v979 = vld [vmem:[%s719 + $0x22] sm:$0xff]
  %v980 = vld [vmem:[%s719 + $0x32] sm:$0xff]
  %v981 = vld [vmem:[%s719 + $0x3a] sm:$0xff]
  %v982 = vld [vmem:[%s719 + $0x4a] sm:$0xff]
  %v983 = vld [vmem:[%s719 + $0x52] sm:$0xff]
  %v984 = vld [vmem:[%s719 + $0x62] sm:$0xff]
  %v985 = vld [vmem:[%s719 + $0x6a] sm:$0xff]
  %v986 = vld [vmem:[%s719 + $0x7a] sm:$0xff]
  %v987 = vld [vmem:[%s719 + $0x82] sm:$0xff]
  %v988 = vld [vmem:[%s719 + $0x92] sm:$0xff]
  %v989 = vld [vmem:[%s719 + $0x9a] sm:$0xff]
  %v990 = vld [vmem:[%s719 + $0xaa] sm:$0xff]
  %v991 = vld [vmem:[%s719 + $0xb2] sm:$0xff]
  %v992 = vld [vmem:[%s719 + $0xc2] sm:$0xff]
  %v993 = vld [vmem:[%s719 + $0xca] sm:$0xff]
  %v994 = vld [vmem:[%s719 + $0xda] sm:$0xff]
  %v995 = vld [vmem:[%s719 + $0xe2] sm:$0xff]
  %v996 = vld [vmem:[%s719 + $0xf2] sm:$0xff]
  %v997 = vld [vmem:[%s719 + $0xfa] sm:$0xff]
  %v998 = vld [vmem:[%s719 + $0x10a] sm:$0xff]
  %v999 = vld [vmem:[%s719 + $0x112] sm:$0xff]
  %v1000 = vld [vmem:[%s719 + $0x122] sm:$0xff]
  %v1001 = vld [vmem:[%s719 + $0x12a] sm:$0xff]
  %v1002 = vld [vmem:[%s719 + $0x13a] sm:$0xff]
  %v1003 = vld [vmem:[%s719 + $0x142] sm:$0xff]
  %v1004 = vld [vmem:[%s719 + $0x152] sm:$0xff]
  %v1005 = vld [vmem:[%s719 + $0x15a] sm:$0xff]
  %v1006 = vld [vmem:[%s719 + $0x16a] sm:$0xff]
  %v1007 = vld [vmem:[%s719 + $0x172] sm:$0xff]
  %v1008 = vld [vmem:[%s719 + $0x1b2] sm:$0xff]
  %v1009 = vld [vmem:[%s719 + $0x1ba] sm:$0xff]
  %v1010 = vld [vmem:[%s719 + $0x1ca] sm:$0xff]
  %v1011 = vld [vmem:[%s719 + $0x1d2] sm:$0xff]
  %v1012 = vld [vmem:[%s719 + $0x1e2] sm:$0xff]
  %v1013 = vld [vmem:[%s719 + $0x1ea] sm:$0xff]
  %v1014 = vld [vmem:[%s719 + $0x1fa] sm:$0xff]
  %v1015 = vld [vmem:[%s719 + $0x202] sm:$0xff]
  %v1016 = vld [vmem:[%s719 + $0x212] sm:$0xff]
  %v1017 = vld [vmem:[%s719 + $0x21a] sm:$0xff]
  %v1018 = vld [vmem:[%s719 + $0x22a] sm:$0xff]
  %v1019 = vld [vmem:[%s719 + $0x232] sm:$0xff]
  %v1020 = vld [vmem:[%s719 + $0x242] sm:$0xff]
  %v1021 = vld [vmem:[%s719 + $0x24a] sm:$0xff]
  %v1022 = vld [vmem:[%s719 + $0x25a] sm:$0xff]
  %v1023 = vld [vmem:[%s719 + $0x262] sm:$0xff]
  %v1024 = vld [vmem:[%s719 + $0x272] sm:$0xff]
  %v1025 = vld [vmem:[%s719 + $0x27a] sm:$0xff]
  %v1026 = vld [vmem:[%s719 + $0x28a] sm:$0xff]
  %v1027 = vld [vmem:[%s719 + $0x292] sm:$0xff]
  %v1028 = vld [vmem:[%s719 + $0x2a2] sm:$0xff]
  %v1029 = vld [vmem:[%s719 + $0x2aa] sm:$0xff]
  %v1030 = vld [vmem:[%s719 + $0x2ba] sm:$0xff]
  %v1031 = vld [vmem:[%s719 + $0x2c2] sm:$0xff]
  %v1032 = vld [vmem:[%s719 + $0x2d2] sm:$0xff]
  %v1033 = vld [vmem:[%s719 + $0x2da] sm:$0xff]
  %v1034 = vld [vmem:[%s719 + $0x2ea] sm:$0xff]
  %v1035 = vld [vmem:[%s719 + $0x2f2] sm:$0xff]
  %v1036 = vld [vmem:[%s719 + $0x302] sm:$0xff]
  %v1037 = vld [vmem:[%s719 + $0x30a] sm:$0xff]
  %v1038 = vld [vmem:[%s719 + $0x31a] sm:$0xff]
  %v1039 = vld [vmem:[%s719 + $0x322] sm:$0xff]
  %v1040 = vmax.f32 %v912, %v976
  %v1041 = vmax.f32 %v913, %v977
  %v1042 = vmax.f32 %v914, %v978
  %v1043 = vmax.f32 %v915, %v979
  %v1044 = vmax.f32 %v916, %v980
  %v1045 = vmax.f32 %v917, %v981
  %v1046 = vmax.f32 %v918, %v982
  %v1047 = vmax.f32 %v919, %v983
  %v1048 = vmax.f32 %v920, %v984
  %v1049 = vmax.f32 %v921, %v985
  %v1050 = vmax.f32 %v922, %v986
  %v1051 = vmax.f32 %v923, %v987
  %v1052 = vmax.f32 %v924, %v988
  %v1053 = vmax.f32 %v925, %v989
  %v1054 = vmax.f32 %v926, %v990
  %v1055 = vmax.f32 %v927, %v991
  %v1056 = vmax.f32 %v928, %v992
  %v1057 = vmax.f32 %v929, %v993
  %v1058 = vmax.f32 %v930, %v994
  %v1059 = vmax.f32 %v931, %v995
  %v1060 = vmax.f32 %v932, %v996
  %v1061 = vmax.f32 %v933, %v997
  %v1062 = vmax.f32 %v934, %v998
  %v1063 = vmax.f32 %v935, %v999
  %v1064 = vmax.f32 %v936, %v1000
  %v1065 = vmax.f32 %v937, %v1001
  %v1066 = vmax.f32 %v938, %v1002
  %v1067 = vmax.f32 %v939, %v1003
  %v1068 = vmax.f32 %v940, %v1004
  %v1069 = vmax.f32 %v941, %v1005
  %v1070 = vmax.f32 %v942, %v1006
  %v1071 = vmax.f32 %v943, %v1007
  %v1072 = vmax.f32 %v944, %v1008
  %v1073 = vmax.f32 %v945, %v1009
  %v1074 = vmax.f32 %v946, %v1010
  %v1075 = vmax.f32 %v947, %v1011
  %v1076 = vmax.f32 %v948, %v1012
  %v1077 = vmax.f32 %v949, %v1013
  %v1078 = vmax.f32 %v950, %v1014
  %v1079 = vmax.f32 %v951, %v1015
  %v1080 = vmax.f32 %v952, %v1016
  %v1081 = vmax.f32 %v953, %v1017
  %v1082 = vmax.f32 %v954, %v1018
  %v1083 = vmax.f32 %v955, %v1019
  %v1084 = vmax.f32 %v956, %v1020
  %v1085 = vmax.f32 %v957, %v1021
  %v1086 = vmax.f32 %v958, %v1022
  %v1087 = vmax.f32 %v959, %v1023
  %v1088 = vmax.f32 %v960, %v1024
  %v1089 = vmax.f32 %v961, %v1025
  %v1090 = vmax.f32 %v962, %v1026
  %v1091 = vmax.f32 %v963, %v1027
  %v1092 = vmax.f32 %v964, %v1028
  %v1093 = vmax.f32 %v965, %v1029
  %v1094 = vmax.f32 %v966, %v1030
  %v1095 = vmax.f32 %v967, %v1031
  %v1096 = vmax.f32 %v968, %v1032
  %v1097 = vmax.f32 %v969, %v1033
  %v1098 = vmax.f32 %v970, %v1034
  %v1099 = vmax.f32 %v971, %v1035
  %v1100 = vmax.f32 %v972, %v1036
  %v1101 = vmax.f32 %v973, %v1037
  %v1102 = vmax.f32 %v974, %v1038
  %v1103 = vmax.f32 %v975, %v1039
  %vm1104 = vcmask 31744
  %v1105 = vsel %vm1104, %v1040, 0.0
  %v1106 = vsel %vm1104, %v1041, 0.0
  %v1107 = vadd.f32 %v1105, %v1106
  %v1108 = vsel %vm1104, %v1042, 0.0
  %v1109 = vadd.f32 %v1107, %v1108
  %v1110 = vsel %vm1104, %v1043, 0.0
  %v1111 = vadd.f32 %v1109, %v1110
  %v1112 = vsel %vm1104, %v1044, 0.0
  %v1113 = vadd.f32 %v1111, %v1112
  %v1114 = vsel %vm1104, %v1045, 0.0
  %v1115 = vadd.f32 %v1113, %v1114
  %v1116 = vsel %vm1104, %v1046, 0.0
  %v1117 = vadd.f32 %v1115, %v1116
  %v1118 = vsel %vm1104, %v1047, 0.0
  %v1119 = vadd.f32 %v1117, %v1118
  %v1120 = vsel %vm1104, %v1048, 0.0
  %v1121 = vadd.f32 %v1119, %v1120
  %v1122 = vsel %vm1104, %v1049, 0.0
  %v1123 = vadd.f32 %v1121, %v1122
  %v1124 = vsel %vm1104, %v1050, 0.0
  %v1125 = vadd.f32 %v1123, %v1124
  %v1126 = vsel %vm1104, %v1051, 0.0
  %v1127 = vadd.f32 %v1125, %v1126
  %v1128 = vsel %vm1104, %v1052, 0.0
  %v1129 = vadd.f32 %v1127, %v1128
  %v1130 = vsel %vm1104, %v1053, 0.0
  %v1131 = vadd.f32 %v1129, %v1130
  %v1132 = vsel %vm1104, %v1054, 0.0
  %v1133 = vadd.f32 %v1131, %v1132
  %v1134 = vsel %vm1104, %v1055, 0.0
  %v1135 = vadd.f32 %v1133, %v1134
  %v1136 = vsel %vm1104, %v1056, 0.0
  %v1137 = vadd.f32 %v1135, %v1136
  %v1138 = vsel %vm1104, %v1057, 0.0
  %v1139 = vadd.f32 %v1137, %v1138
  %v1140 = vsel %vm1104, %v1058, 0.0
  %v1141 = vadd.f32 %v1139, %v1140
  %v1142 = vsel %vm1104, %v1059, 0.0
  %v1143 = vadd.f32 %v1141, %v1142
  %v1144 = vsel %vm1104, %v1060, 0.0
  %v1145 = vadd.f32 %v1143, %v1144
  %v1146 = vsel %vm1104, %v1061, 0.0
  %v1147 = vadd.f32 %v1145, %v1146
  %v1148 = vsel %vm1104, %v1062, 0.0
  %v1149 = vadd.f32 %v1147, %v1148
  %v1150 = vsel %vm1104, %v1063, 0.0
  %v1151 = vadd.f32 %v1149, %v1150
  %v1152 = vsel %vm1104, %v1064, 0.0
  %v1153 = vadd.f32 %v1151, %v1152
  %v1154 = vsel %vm1104, %v1065, 0.0
  %v1155 = vadd.f32 %v1153, %v1154
  %v1156 = vsel %vm1104, %v1066, 0.0
  %v1157 = vadd.f32 %v1155, %v1156
  %v1158 = vsel %vm1104, %v1067, 0.0
  %v1159 = vadd.f32 %v1157, %v1158
  %v1160 = vsel %vm1104, %v1068, 0.0
  %v1161 = vadd.f32 %v1159, %v1160
  %v1162 = vsel %vm1104, %v1069, 0.0
  %v1163 = vadd.f32 %v1161, %v1162
  %v1164 = vsel %vm1104, %v1070, 0.0
  %v1165 = vadd.f32 %v1163, %v1164
  %v1166 = vsel %vm1104, %v1071, 0.0
  %v1167 = vadd.f32 %v1165, %v1166
  %v1168 = vrot.slane %v1167, 4
  %v1169 = vadd.f32 %v1167, %v1168
  %v1170 = vrot.slane %v1169, 2
  %v1171 = vadd.f32 %v1169, %v1170
  %v1172 = vrot.slane %v1171, 1
  %v1173 = vadd.f32 %v1171, %v1172
  %v1174 = vsel %vm1104, %v1072, 0.0
  %v1175 = vsel %vm1104, %v1073, 0.0
  %v1176 = vadd.f32 %v1174, %v1175
  %v1177 = vsel %vm1104, %v1074, 0.0
  %v1178 = vadd.f32 %v1176, %v1177
  %v1179 = vsel %vm1104, %v1075, 0.0
  %v1180 = vadd.f32 %v1178, %v1179
  %v1181 = vsel %vm1104, %v1076, 0.0
  %v1182 = vadd.f32 %v1180, %v1181
  %v1183 = vsel %vm1104, %v1077, 0.0
  %v1184 = vadd.f32 %v1182, %v1183
  %v1185 = vsel %vm1104, %v1078, 0.0
  %v1186 = vadd.f32 %v1184, %v1185
  %v1187 = vsel %vm1104, %v1079, 0.0
  %v1188 = vadd.f32 %v1186, %v1187
  %v1189 = vsel %vm1104, %v1080, 0.0
  %v1190 = vadd.f32 %v1188, %v1189
  %v1191 = vsel %vm1104, %v1081, 0.0
  %v1192 = vadd.f32 %v1190, %v1191
  %v1193 = vsel %vm1104, %v1082, 0.0
  %v1194 = vadd.f32 %v1192, %v1193
  %v1195 = vsel %vm1104, %v1083, 0.0
  %v1196 = vadd.f32 %v1194, %v1195
  %v1197 = vsel %vm1104, %v1084, 0.0
  %v1198 = vadd.f32 %v1196, %v1197
  %v1199 = vsel %vm1104, %v1085, 0.0
  %v1200 = vadd.f32 %v1198, %v1199
  %v1201 = vsel %vm1104, %v1086, 0.0
  %v1202 = vadd.f32 %v1200, %v1201
  %v1203 = vsel %vm1104, %v1087, 0.0
  %v1204 = vadd.f32 %v1202, %v1203
  %v1205 = vsel %vm1104, %v1088, 0.0
  %v1206 = vadd.f32 %v1204, %v1205
  %v1207 = vsel %vm1104, %v1089, 0.0
  %v1208 = vadd.f32 %v1206, %v1207
  %v1209 = vsel %vm1104, %v1090, 0.0
  %v1210 = vadd.f32 %v1208, %v1209
  %v1211 = vsel %vm1104, %v1091, 0.0
  %v1212 = vadd.f32 %v1210, %v1211
  %v1213 = vsel %vm1104, %v1092, 0.0
  %v1214 = vadd.f32 %v1212, %v1213
  %v1215 = vsel %vm1104, %v1093, 0.0
  %v1216 = vadd.f32 %v1214, %v1215
  %v1217 = vsel %vm1104, %v1094, 0.0
  %v1218 = vadd.f32 %v1216, %v1217
  %v1219 = vsel %vm1104, %v1095, 0.0
  %v1220 = vadd.f32 %v1218, %v1219
  %v1221 = vsel %vm1104, %v1096, 0.0
  %v1222 = vadd.f32 %v1220, %v1221
  %v1223 = vsel %vm1104, %v1097, 0.0
  %v1224 = vadd.f32 %v1222, %v1223
  %v1225 = vsel %vm1104, %v1098, 0.0
  %v1226 = vadd.f32 %v1224, %v1225
  %v1227 = vsel %vm1104, %v1099, 0.0
  %v1228 = vadd.f32 %v1226, %v1227
  %v1229 = vsel %vm1104, %v1100, 0.0
  %v1230 = vadd.f32 %v1228, %v1229
  %v1231 = vsel %vm1104, %v1101, 0.0
  %v1232 = vadd.f32 %v1230, %v1231
  %v1233 = vsel %vm1104, %v1102, 0.0
  %v1234 = vadd.f32 %v1232, %v1233
  %v1235 = vsel %vm1104, %v1103, 0.0
  %v1236 = vadd.f32 %v1234, %v1235
  %v1237 = vrot.slane %v1236, 4
  %v1238 = vadd.f32 %v1236, %v1237
  %v1239 = vrot.slane %v1238, 2
  %v1240 = vadd.f32 %v1238, %v1239
  %v1241 = vrot.slane %v1240, 1
  %v1242 = vadd.f32 %v1240, %v1241
  %v1243 = vsel %vm1104, %v1173, 0.0
  %v1244 = vsel %vm1104, %v1242, 0.0
  %v1245 = vadd.f32 %v1243, %v1244
  %v1246 = vmul.f32 %v1245, 0.001953125
  %v1247 = vsub.f32 %v1040, %v1246
  %v1248 = vsub.f32 %v1041, %v1246
  %v1249 = vsub.f32 %v1042, %v1246
  %v1250 = vsub.f32 %v1043, %v1246
  %v1251 = vsub.f32 %v1044, %v1246
  %v1252 = vsub.f32 %v1045, %v1246
  %v1253 = vsub.f32 %v1046, %v1246
  %v1254 = vsub.f32 %v1047, %v1246
  %v1255 = vsub.f32 %v1048, %v1246
  %v1256 = vsub.f32 %v1049, %v1246
  %v1257 = vsub.f32 %v1050, %v1246
  %v1258 = vsub.f32 %v1051, %v1246
  %v1259 = vsub.f32 %v1052, %v1246
  %v1260 = vsub.f32 %v1053, %v1246
  %v1261 = vsub.f32 %v1054, %v1246
  %v1262 = vsub.f32 %v1055, %v1246
  %v1263 = vsub.f32 %v1056, %v1246
  %v1264 = vsub.f32 %v1057, %v1246
  %v1265 = vsub.f32 %v1058, %v1246
  %v1266 = vsub.f32 %v1059, %v1246
  %v1267 = vsub.f32 %v1060, %v1246
  %v1268 = vsub.f32 %v1061, %v1246
  %v1269 = vsub.f32 %v1062, %v1246
  %v1270 = vsub.f32 %v1063, %v1246
  %v1271 = vsub.f32 %v1064, %v1246
  %v1272 = vsub.f32 %v1065, %v1246
  %v1273 = vsub.f32 %v1066, %v1246
  %v1274 = vsub.f32 %v1067, %v1246
  %v1275 = vsub.f32 %v1068, %v1246
  %v1276 = vsub.f32 %v1069, %v1246
  %v1277 = vsub.f32 %v1070, %v1246
  %v1278 = vsub.f32 %v1071, %v1246
  %v1279 = vsub.f32 %v1072, %v1246
  %v1280 = vsub.f32 %v1073, %v1246
  %v1281 = vsub.f32 %v1074, %v1246
  %v1282 = vsub.f32 %v1075, %v1246
  %v1283 = vsub.f32 %v1076, %v1246
  %v1284 = vsub.f32 %v1077, %v1246
  %v1285 = vsub.f32 %v1078, %v1246
  %v1286 = vsub.f32 %v1079, %v1246
  %v1287 = vsub.f32 %v1080, %v1246
  %v1288 = vsub.f32 %v1081, %v1246
  %v1289 = vsub.f32 %v1082, %v1246
  %v1290 = vsub.f32 %v1083, %v1246
  %v1291 = vsub.f32 %v1084, %v1246
  %v1292 = vsub.f32 %v1085, %v1246
  %v1293 = vsub.f32 %v1086, %v1246
  %v1294 = vsub.f32 %v1087, %v1246
  %v1295 = vsub.f32 %v1088, %v1246
  %v1296 = vsub.f32 %v1089, %v1246
  %v1297 = vsub.f32 %v1090, %v1246
  %v1298 = vsub.f32 %v1091, %v1246
  %v1299 = vsub.f32 %v1092, %v1246
  %v1300 = vsub.f32 %v1093, %v1246
  %v1301 = vsub.f32 %v1094, %v1246
  %v1302 = vsub.f32 %v1095, %v1246
  %v1303 = vsub.f32 %v1096, %v1246
  %v1304 = vsub.f32 %v1097, %v1246
  %v1305 = vsub.f32 %v1098, %v1246
  %v1306 = vsub.f32 %v1099, %v1246
  %v1307 = vsub.f32 %v1100, %v1246
  %v1308 = vsub.f32 %v1101, %v1246
  %v1309 = vsub.f32 %v1102, %v1246
  %v1310 = vsub.f32 %v1103, %v1246
  %v1311 = vmul.f32 %v1247, %v1247
  %v1312 = vmul.f32 %v1248, %v1248
  %v1313 = vmul.f32 %v1249, %v1249
  %v1314 = vmul.f32 %v1250, %v1250
  %v1315 = vmul.f32 %v1251, %v1251
  %v1316 = vmul.f32 %v1252, %v1252
  %v1317 = vmul.f32 %v1253, %v1253
  %v1318 = vmul.f32 %v1254, %v1254
  %v1319 = vmul.f32 %v1255, %v1255
  %v1320 = vmul.f32 %v1256, %v1256
  %v1321 = vmul.f32 %v1257, %v1257
  %v1322 = vmul.f32 %v1258, %v1258
  %v1323 = vmul.f32 %v1259, %v1259
  %v1324 = vmul.f32 %v1260, %v1260
  %v1325 = vmul.f32 %v1261, %v1261
  %v1326 = vmul.f32 %v1262, %v1262
  %v1327 = vmul.f32 %v1263, %v1263
  %v1328 = vmul.f32 %v1264, %v1264
  %v1329 = vmul.f32 %v1265, %v1265
  %v1330 = vmul.f32 %v1266, %v1266
  %v1331 = vmul.f32 %v1267, %v1267
  %v1332 = vmul.f32 %v1268, %v1268
  %v1333 = vmul.f32 %v1269, %v1269
  %v1334 = vmul.f32 %v1270, %v1270
  %v1335 = vmul.f32 %v1271, %v1271
  %v1336 = vmul.f32 %v1272, %v1272
  %v1337 = vmul.f32 %v1273, %v1273
  %v1338 = vmul.f32 %v1274, %v1274
  %v1339 = vmul.f32 %v1275, %v1275
  %v1340 = vmul.f32 %v1276, %v1276
  %v1341 = vmul.f32 %v1277, %v1277
  %v1342 = vmul.f32 %v1278, %v1278
  %v1343 = vmul.f32 %v1279, %v1279
  %v1344 = vmul.f32 %v1280, %v1280
  %v1345 = vmul.f32 %v1281, %v1281
  %v1346 = vmul.f32 %v1282, %v1282
  %v1347 = vmul.f32 %v1283, %v1283
  %v1348 = vmul.f32 %v1284, %v1284
  %v1349 = vmul.f32 %v1285, %v1285
  %v1350 = vmul.f32 %v1286, %v1286
  %v1351 = vmul.f32 %v1287, %v1287
  %v1352 = vmul.f32 %v1288, %v1288
  %v1353 = vmul.f32 %v1289, %v1289
  %v1354 = vmul.f32 %v1290, %v1290
  %v1355 = vmul.f32 %v1291, %v1291
  %v1356 = vmul.f32 %v1292, %v1292
  %v1357 = vmul.f32 %v1293, %v1293
  %v1358 = vmul.f32 %v1294, %v1294
  %v1359 = vmul.f32 %v1295, %v1295
  %v1360 = vmul.f32 %v1296, %v1296
  %v1361 = vmul.f32 %v1297, %v1297
  %v1362 = vmul.f32 %v1298, %v1298
  %v1363 = vmul.f32 %v1299, %v1299
  %v1364 = vmul.f32 %v1300, %v1300
  %v1365 = vmul.f32 %v1301, %v1301
  %v1366 = vmul.f32 %v1302, %v1302
  %v1367 = vmul.f32 %v1303, %v1303
  %v1368 = vmul.f32 %v1304, %v1304
  %v1369 = vmul.f32 %v1305, %v1305
  %v1370 = vmul.f32 %v1306, %v1306
  %v1371 = vmul.f32 %v1307, %v1307
  %v1372 = vmul.f32 %v1308, %v1308
  %v1373 = vmul.f32 %v1309, %v1309
  %v1374 = vmul.f32 %v1310, %v1310
  %v1375 = vsel %vm1104, %v1311, 0.0
  %v1376 = vsel %vm1104, %v1312, 0.0
  %v1377 = vadd.f32 %v1375, %v1376
  %v1378 = vsel %vm1104, %v1313, 0.0
  %v1379 = vadd.f32 %v1377, %v1378
  %v1380 = vsel %vm1104, %v1314, 0.0
  %v1381 = vadd.f32 %v1379, %v1380
  %v1382 = vsel %vm1104, %v1315, 0.0
  %v1383 = vadd.f32 %v1381, %v1382
  %v1384 = vsel %vm1104, %v1316, 0.0
  %v1385 = vadd.f32 %v1383, %v1384
  %v1386 = vsel %vm1104, %v1317, 0.0
  %v1387 = vadd.f32 %v1385, %v1386
  %v1388 = vsel %vm1104, %v1318, 0.0
  %v1389 = vadd.f32 %v1387, %v1388
  %v1390 = vsel %vm1104, %v1319, 0.0
  %v1391 = vadd.f32 %v1389, %v1390
  %v1392 = vsel %vm1104, %v1320, 0.0
  %v1393 = vadd.f32 %v1391, %v1392
  %v1394 = vsel %vm1104, %v1321, 0.0
  %v1395 = vadd.f32 %v1393, %v1394
  %v1396 = vsel %vm1104, %v1322, 0.0
  %v1397 = vadd.f32 %v1395, %v1396
  %v1398 = vsel %vm1104, %v1323, 0.0
  %v1399 = vadd.f32 %v1397, %v1398
  %v1400 = vsel %vm1104, %v1324, 0.0
  %v1401 = vadd.f32 %v1399, %v1400
  %v1402 = vsel %vm1104, %v1325, 0.0
  %v1403 = vadd.f32 %v1401, %v1402
  %v1404 = vsel %vm1104, %v1326, 0.0
  %v1405 = vadd.f32 %v1403, %v1404
  %v1406 = vsel %vm1104, %v1327, 0.0
  %v1407 = vadd.f32 %v1405, %v1406
  %v1408 = vsel %vm1104, %v1328, 0.0
  %v1409 = vadd.f32 %v1407, %v1408
  %v1410 = vsel %vm1104, %v1329, 0.0
  %v1411 = vadd.f32 %v1409, %v1410
  %v1412 = vsel %vm1104, %v1330, 0.0
  %v1413 = vadd.f32 %v1411, %v1412
  %v1414 = vsel %vm1104, %v1331, 0.0
  %v1415 = vadd.f32 %v1413, %v1414
  %v1416 = vsel %vm1104, %v1332, 0.0
  %v1417 = vadd.f32 %v1415, %v1416
  %v1418 = vsel %vm1104, %v1333, 0.0
  %v1419 = vadd.f32 %v1417, %v1418
  %v1420 = vsel %vm1104, %v1334, 0.0
  %v1421 = vadd.f32 %v1419, %v1420
  %v1422 = vsel %vm1104, %v1335, 0.0
  %v1423 = vadd.f32 %v1421, %v1422
  %v1424 = vsel %vm1104, %v1336, 0.0
  %v1425 = vadd.f32 %v1423, %v1424
  %v1426 = vsel %vm1104, %v1337, 0.0
  %v1427 = vadd.f32 %v1425, %v1426
  %v1428 = vsel %vm1104, %v1338, 0.0
  %v1429 = vadd.f32 %v1427, %v1428
  %v1430 = vsel %vm1104, %v1339, 0.0
  %v1431 = vadd.f32 %v1429, %v1430
  %v1432 = vsel %vm1104, %v1340, 0.0
  %v1433 = vadd.f32 %v1431, %v1432
  %v1434 = vsel %vm1104, %v1341, 0.0
  %v1435 = vadd.f32 %v1433, %v1434
  %v1436 = vsel %vm1104, %v1342, 0.0
  %v1437 = vadd.f32 %v1435, %v1436
  %v1438 = vrot.slane %v1437, 4
  %v1439 = vadd.f32 %v1437, %v1438
  %v1440 = vrot.slane %v1439, 2
  %v1441 = vadd.f32 %v1439, %v1440
  %v1442 = vrot.slane %v1441, 1
  %v1443 = vadd.f32 %v1441, %v1442
  %v1444 = vsel %vm1104, %v1343, 0.0
  %v1445 = vsel %vm1104, %v1344, 0.0
  %v1446 = vadd.f32 %v1444, %v1445
  %v1447 = vsel %vm1104, %v1345, 0.0
  %v1448 = vadd.f32 %v1446, %v1447
  %v1449 = vsel %vm1104, %v1346, 0.0
  %v1450 = vadd.f32 %v1448, %v1449
  %v1451 = vsel %vm1104, %v1347, 0.0
  %v1452 = vadd.f32 %v1450, %v1451
  %v1453 = vsel %vm1104, %v1348, 0.0
  %v1454 = vadd.f32 %v1452, %v1453
  %v1455 = vsel %vm1104, %v1349, 0.0
  %v1456 = vadd.f32 %v1454, %v1455
  %v1457 = vsel %vm1104, %v1350, 0.0
  %v1458 = vadd.f32 %v1456, %v1457
  %v1459 = vsel %vm1104, %v1351, 0.0
  %v1460 = vadd.f32 %v1458, %v1459
  %v1461 = vsel %vm1104, %v1352, 0.0
  %v1462 = vadd.f32 %v1460, %v1461
  %v1463 = vsel %vm1104, %v1353, 0.0
  %v1464 = vadd.f32 %v1462, %v1463
  %v1465 = vsel %vm1104, %v1354, 0.0
  %v1466 = vadd.f32 %v1464, %v1465
  %v1467 = vsel %vm1104, %v1355, 0.0
  %v1468 = vadd.f32 %v1466, %v1467
  %v1469 = vsel %vm1104, %v1356, 0.0
  %v1470 = vadd.f32 %v1468, %v1469
  %v1471 = vsel %vm1104, %v1357, 0.0
  %v1472 = vadd.f32 %v1470, %v1471
  %v1473 = vsel %vm1104, %v1358, 0.0
  %v1474 = vadd.f32 %v1472, %v1473
  %v1475 = vsel %vm1104, %v1359, 0.0
  %v1476 = vadd.f32 %v1474, %v1475
  %v1477 = vsel %vm1104, %v1360, 0.0
  %v1478 = vadd.f32 %v1476, %v1477
  %v1479 = vsel %vm1104, %v1361, 0.0
  %v1480 = vadd.f32 %v1478, %v1479
  %v1481 = vsel %vm1104, %v1362, 0.0
  %v1482 = vadd.f32 %v1480, %v1481
  %v1483 = vsel %vm1104, %v1363, 0.0
  %v1484 = vadd.f32 %v1482, %v1483
  %v1485 = vsel %vm1104, %v1364, 0.0
  %v1486 = vadd.f32 %v1484, %v1485
  %v1487 = vsel %vm1104, %v1365, 0.0
  %v1488 = vadd.f32 %v1486, %v1487
  %v1489 = vsel %vm1104, %v1366, 0.0
  %v1490 = vadd.f32 %v1488, %v1489
  %v1491 = vsel %vm1104, %v1367, 0.0
  %v1492 = vadd.f32 %v1490, %v1491
  %v1493 = vsel %vm1104, %v1368, 0.0
  %v1494 = vadd.f32 %v1492, %v1493
  %v1495 = vsel %vm1104, %v1369, 0.0
  %v1496 = vadd.f32 %v1494, %v1495
  %v1497 = vsel %vm1104, %v1370, 0.0
  %v1498 = vadd.f32 %v1496, %v1497
  %v1499 = vsel %vm1104, %v1371, 0.0
  %v1500 = vadd.f32 %v1498, %v1499
  %v1501 = vsel %vm1104, %v1372, 0.0
  %v1502 = vadd.f32 %v1500, %v1501
  %v1503 = vsel %vm1104, %v1373, 0.0
  %v1504 = vadd.f32 %v1502, %v1503
  %v1505 = vsel %vm1104, %v1374, 0.0
  %v1506 = vadd.f32 %v1504, %v1505
  %v1507 = vrot.slane %v1506, 4
  %v1508 = vadd.f32 %v1506, %v1507
  %v1509 = vrot.slane %v1508, 2
  %v1510 = vadd.f32 %v1508, %v1509
  %v1511 = vrot.slane %v1510, 1
  %v1512 = vadd.f32 %v1510, %v1511
  %v1513 = vsel %vm1104, %v1443, 0.0
  %v1514 = vsel %vm1104, %v1512, 0.0
  %v1515 = vadd.f32 %v1513, %v1514
  %v1516 = vmul.f32 %v1515, 0.001953125
  %v1517 = vld [vmem:[%s1] sm:$0x1]
  %v1518 = vadd.f32 %v1516, 1e-05
  %v1519 = vrsqrt.pop %v1518
  %v1520 = vmul.f32 %v1517, %v1519
  %v1521 = vld [vmem:[%s2] sm:$0x1]
  %v1522 = vmul.f32 %v1246, %v1520
  %v1523 = vsub.f32 %v1521, %v1522
  %v1525 = vlaneseq
  %v1526 = vshrl.u32 %v1525, 7
  %v1527 = vsub.s32 0, %v1526
  %v1528 = vrot.slane %v1520, %v1527
  %v1530 = vmul.f32 %v1040, %v1528
  %v1531 = vmul.f32 %v1041, %v1528
  %v1532 = vmul.f32 %v1042, %v1528
  %v1533 = vmul.f32 %v1043, %v1528
  %v1534 = vmul.f32 %v1044, %v1528
  %v1535 = vmul.f32 %v1045, %v1528
  %v1536 = vmul.f32 %v1046, %v1528
  %v1537 = vmul.f32 %v1047, %v1528
  %v1538 = vmul.f32 %v1048, %v1528
  %v1539 = vmul.f32 %v1049, %v1528
  %v1540 = vmul.f32 %v1050, %v1528
  %v1541 = vmul.f32 %v1051, %v1528
  %v1542 = vmul.f32 %v1052, %v1528
  %v1543 = vmul.f32 %v1053, %v1528
  %v1544 = vmul.f32 %v1054, %v1528
  %v1545 = vmul.f32 %v1055, %v1528
  %v1546 = vmul.f32 %v1056, %v1528
  %v1547 = vmul.f32 %v1057, %v1528
  %v1548 = vmul.f32 %v1058, %v1528
  %v1549 = vmul.f32 %v1059, %v1528
  %v1550 = vmul.f32 %v1060, %v1528
  %v1551 = vmul.f32 %v1061, %v1528
  %v1552 = vmul.f32 %v1062, %v1528
  %v1553 = vmul.f32 %v1063, %v1528
  %v1554 = vmul.f32 %v1064, %v1528
  %v1555 = vmul.f32 %v1065, %v1528
  %v1556 = vmul.f32 %v1066, %v1528
  %v1557 = vmul.f32 %v1067, %v1528
  %v1558 = vmul.f32 %v1068, %v1528
  %v1559 = vmul.f32 %v1069, %v1528
  %v1560 = vmul.f32 %v1070, %v1528
  %v1561 = vmul.f32 %v1071, %v1528
  %v1562 = vmul.f32 %v1072, %v1528
  %v1563 = vmul.f32 %v1073, %v1528
  %v1564 = vmul.f32 %v1074, %v1528
  %v1565 = vmul.f32 %v1075, %v1528
  %v1566 = vmul.f32 %v1076, %v1528
  %v1567 = vmul.f32 %v1077, %v1528
  %v1568 = vmul.f32 %v1078, %v1528
  %v1569 = vmul.f32 %v1079, %v1528
  %v1570 = vmul.f32 %v1080, %v1528
  %v1571 = vmul.f32 %v1081, %v1528
  %v1572 = vmul.f32 %v1082, %v1528
  %v1573 = vmul.f32 %v1083, %v1528
  %v1574 = vmul.f32 %v1084, %v1528
  %v1575 = vmul.f32 %v1085, %v1528
  %v1576 = vmul.f32 %v1086, %v1528
  %v1577 = vmul.f32 %v1087, %v1528
  %v1578 = vmul.f32 %v1088, %v1528
  %v1579 = vmul.f32 %v1089, %v1528
  %v1580 = vmul.f32 %v1090, %v1528
  %v1581 = vmul.f32 %v1091, %v1528
  %v1582 = vmul.f32 %v1092, %v1528
  %v1583 = vmul.f32 %v1093, %v1528
  %v1584 = vmul.f32 %v1094, %v1528
  %v1585 = vmul.f32 %v1095, %v1528
  %v1586 = vmul.f32 %v1096, %v1528
  %v1587 = vmul.f32 %v1097, %v1528
  %v1588 = vmul.f32 %v1098, %v1528
  %v1589 = vmul.f32 %v1099, %v1528
  %v1590 = vmul.f32 %v1100, %v1528
  %v1591 = vmul.f32 %v1101, %v1528
  %v1592 = vmul.f32 %v1102, %v1528
  %v1593 = vmul.f32 %v1103, %v1528
  %v1595 = vlaneseq
  %v1596 = vshrl.u32 %v1595, 7
  %v1597 = vsub.s32 0, %v1596
  %v1598 = vrot.slane %v1523, %v1597
  %v1600 = vadd.f32 %v1530, %v1598
  %v1601 = vadd.f32 %v1531, %v1598
  %v1602 = vadd.f32 %v1532, %v1598
  %v1603 = vadd.f32 %v1533, %v1598
  %v1604 = vadd.f32 %v1534, %v1598
  %v1605 = vadd.f32 %v1535, %v1598
  %v1606 = vadd.f32 %v1536, %v1598
  %v1607 = vadd.f32 %v1537, %v1598
  %v1608 = vadd.f32 %v1538, %v1598
  %v1609 = vadd.f32 %v1539, %v1598
  %v1610 = vadd.f32 %v1540, %v1598
  %v1611 = vadd.f32 %v1541, %v1598
  %v1612 = vadd.f32 %v1542, %v1598
  %v1613 = vadd.f32 %v1543, %v1598
  %v1614 = vadd.f32 %v1544, %v1598
  %v1615 = vadd.f32 %v1545, %v1598
  %v1616 = vadd.f32 %v1546, %v1598
  %v1617 = vadd.f32 %v1547, %v1598
  %v1618 = vadd.f32 %v1548, %v1598
  %v1619 = vadd.f32 %v1549, %v1598
  %v1620 = vadd.f32 %v1550, %v1598
  %v1621 = vadd.f32 %v1551, %v1598
  %v1622 = vadd.f32 %v1552, %v1598
  %v1623 = vadd.f32 %v1553, %v1598
  %v1624 = vadd.f32 %v1554, %v1598
  %v1625 = vadd.f32 %v1555, %v1598
  %v1626 = vadd.f32 %v1556, %v1598
  %v1627 = vadd.f32 %v1557, %v1598
  %v1628 = vadd.f32 %v1558, %v1598
  %v1629 = vadd.f32 %v1559, %v1598
  %v1630 = vadd.f32 %v1560, %v1598
  %v1631 = vadd.f32 %v1561, %v1598
  %v1632 = vadd.f32 %v1562, %v1598
  %v1633 = vadd.f32 %v1563, %v1598
  %v1634 = vadd.f32 %v1564, %v1598
  %v1635 = vadd.f32 %v1565, %v1598
  %v1636 = vadd.f32 %v1566, %v1598
  %v1637 = vadd.f32 %v1567, %v1598
  %v1638 = vadd.f32 %v1568, %v1598
  %v1639 = vadd.f32 %v1569, %v1598
  %v1640 = vadd.f32 %v1570, %v1598
  %v1641 = vadd.f32 %v1571, %v1598
  %v1642 = vadd.f32 %v1572, %v1598
  %v1643 = vadd.f32 %v1573, %v1598
  %v1644 = vadd.f32 %v1574, %v1598
  %v1645 = vadd.f32 %v1575, %v1598
  %v1646 = vadd.f32 %v1576, %v1598
  %v1647 = vadd.f32 %v1577, %v1598
  %v1648 = vadd.f32 %v1578, %v1598
  %v1649 = vadd.f32 %v1579, %v1598
  %v1650 = vadd.f32 %v1580, %v1598
  %v1651 = vadd.f32 %v1581, %v1598
  %v1652 = vadd.f32 %v1582, %v1598
  %v1653 = vadd.f32 %v1583, %v1598
  %v1654 = vadd.f32 %v1584, %v1598
  %v1655 = vadd.f32 %v1585, %v1598
  %v1656 = vadd.f32 %v1586, %v1598
  %v1657 = vadd.f32 %v1587, %v1598
  %v1658 = vadd.f32 %v1588, %v1598
  %v1659 = vadd.f32 %v1589, %v1598
  %v1660 = vadd.f32 %v1590, %v1598
  %v1661 = vadd.f32 %v1591, %v1598
  %v1662 = vadd.f32 %v1592, %v1598
  %v1663 = vadd.f32 %v1593, %v1598
  %1664 = vst.msk [vmem:[%s3] sm:$0xff] %vm1104, %v1600
  %1665 = vst.msk [vmem:[%s3 + $0x8] sm:$0xff] %vm1104, %v1601
  %1666 = vst.msk [vmem:[%s3 + $0x10] sm:$0xff] %vm1104, %v1602
  %1667 = vst.msk [vmem:[%s3 + $0x18] sm:$0xff] %vm1104, %v1603
  %1668 = vst.msk [vmem:[%s3 + $0x20] sm:$0xff] %vm1104, %v1604
  %1669 = vst.msk [vmem:[%s3 + $0x28] sm:$0xff] %vm1104, %v1605
  %1670 = vst.msk [vmem:[%s3 + $0x30] sm:$0xff] %vm1104, %v1606
  %1671 = vst.msk [vmem:[%s3 + $0x38] sm:$0xff] %vm1104, %v1607
  %1672 = vst.msk [vmem:[%s3 + $0x40] sm:$0xff] %vm1104, %v1608
  %1673 = vst.msk [vmem:[%s3 + $0x48] sm:$0xff] %vm1104, %v1609
  %1674 = vst.msk [vmem:[%s3 + $0x50] sm:$0xff] %vm1104, %v1610
  %1675 = vst.msk [vmem:[%s3 + $0x58] sm:$0xff] %vm1104, %v1611
  %1676 = vst.msk [vmem:[%s3 + $0x60] sm:$0xff] %vm1104, %v1612
  %1677 = vst.msk [vmem:[%s3 + $0x68] sm:$0xff] %vm1104, %v1613
  %1678 = vst.msk [vmem:[%s3 + $0x70] sm:$0xff] %vm1104, %v1614
  %1679 = vst.msk [vmem:[%s3 + $0x78] sm:$0xff] %vm1104, %v1615
  %1680 = vst.msk [vmem:[%s3 + $0x80] sm:$0xff] %vm1104, %v1616
  %1681 = vst.msk [vmem:[%s3 + $0x88] sm:$0xff] %vm1104, %v1617
  %1682 = vst.msk [vmem:[%s3 + $0x90] sm:$0xff] %vm1104, %v1618
  %1683 = vst.msk [vmem:[%s3 + $0x98] sm:$0xff] %vm1104, %v1619
  %1684 = vst.msk [vmem:[%s3 + $0xa0] sm:$0xff] %vm1104, %v1620
  %1685 = vst.msk [vmem:[%s3 + $0xa8] sm:$0xff] %vm1104, %v1621
  %1686 = vst.msk [vmem:[%s3 + $0xb0] sm:$0xff] %vm1104, %v1622
  %1687 = vst.msk [vmem:[%s3 + $0xb8] sm:$0xff] %vm1104, %v1623
  %1688 = vst.msk [vmem:[%s3 + $0xc0] sm:$0xff] %vm1104, %v1624
  %1689 = vst.msk [vmem:[%s3 + $0xc8] sm:$0xff] %vm1104, %v1625
  %1690 = vst.msk [vmem:[%s3 + $0xd0] sm:$0xff] %vm1104, %v1626
  %1691 = vst.msk [vmem:[%s3 + $0xd8] sm:$0xff] %vm1104, %v1627
  %1692 = vst.msk [vmem:[%s3 + $0xe0] sm:$0xff] %vm1104, %v1628
  %1693 = vst.msk [vmem:[%s3 + $0xe8] sm:$0xff] %vm1104, %v1629
  %1694 = vst.msk [vmem:[%s3 + $0xf0] sm:$0xff] %vm1104, %v1630
  %1695 = vst.msk [vmem:[%s3 + $0xf8] sm:$0xff] %vm1104, %v1631
  %1696 = vst.msk [vmem:[%s3 + $0x100] sm:$0xff] %vm1104, %v1632
  %1697 = vst.msk [vmem:[%s3 + $0x108] sm:$0xff] %vm1104, %v1633
  %1698 = vst.msk [vmem:[%s3 + $0x110] sm:$0xff] %vm1104, %v1634
  %1699 = vst.msk [vmem:[%s3 + $0x118] sm:$0xff] %vm1104, %v1635
  %1700 = vst.msk [vmem:[%s3 + $0x120] sm:$0xff] %vm1104, %v1636
  %1701 = vst.msk [vmem:[%s3 + $0x128] sm:$0xff] %vm1104, %v1637
  %1702 = vst.msk [vmem:[%s3 + $0x130] sm:$0xff] %vm1104, %v1638
  %1703 = vst.msk [vmem:[%s3 + $0x138] sm:$0xff] %vm1104, %v1639
  %1704 = vst.msk [vmem:[%s3 + $0x140] sm:$0xff] %vm1104, %v1640
  %1705 = vst.msk [vmem:[%s3 + $0x148] sm:$0xff] %vm1104, %v1641
  %1706 = vst.msk [vmem:[%s3 + $0x150] sm:$0xff] %vm1104, %v1642
  %1707 = vst.msk [vmem:[%s3 + $0x158] sm:$0xff] %vm1104, %v1643
  %1708 = vst.msk [vmem:[%s3 + $0x160] sm:$0xff] %vm1104, %v1644
  %1709 = vst.msk [vmem:[%s3 + $0x168] sm:$0xff] %vm1104, %v1645
  %1710 = vst.msk [vmem:[%s3 + $0x170] sm:$0xff] %vm1104, %v1646
  %1711 = vst.msk [vmem:[%s3 + $0x178] sm:$0xff] %vm1104, %v1647
  %1712 = vst.msk [vmem:[%s3 + $0x180] sm:$0xff] %vm1104, %v1648
  %1713 = vst.msk [vmem:[%s3 + $0x188] sm:$0xff] %vm1104, %v1649
  %1714 = vst.msk [vmem:[%s3 + $0x190] sm:$0xff] %vm1104, %v1650
  %1715 = vst.msk [vmem:[%s3 + $0x198] sm:$0xff] %vm1104, %v1651
  %1716 = vst.msk [vmem:[%s3 + $0x1a0] sm:$0xff] %vm1104, %v1652
  %1717 = vst.msk [vmem:[%s3 + $0x1a8] sm:$0xff] %vm1104, %v1653
  %1718 = vst.msk [vmem:[%s3 + $0x1b0] sm:$0xff] %vm1104, %v1654
  %1719 = vst.msk [vmem:[%s3 + $0x1b8] sm:$0xff] %vm1104, %v1655
  %1720 = vst.msk [vmem:[%s3 + $0x1c0] sm:$0xff] %vm1104, %v1656
  %1721 = vst.msk [vmem:[%s3 + $0x1c8] sm:$0xff] %vm1104, %v1657
  %1722 = vst.msk [vmem:[%s3 + $0x1d0] sm:$0xff] %vm1104, %v1658
  %1723 = vst.msk [vmem:[%s3 + $0x1d8] sm:$0xff] %vm1104, %v1659
  %1724 = vst.msk [vmem:[%s3 + $0x1e0] sm:$0xff] %vm1104, %v1660
  %1725 = vst.msk [vmem:[%s3 + $0x1e8] sm:$0xff] %vm1104, %v1661
  %1726 = vst.msk [vmem:[%s3 + $0x1f0] sm:$0xff] %vm1104, %v1662
  %1727 = vst.msk [vmem:[%s3 + $0x1f8] sm:$0xff] %vm1104, %v1663
  // Predicated region
  $region14: #{tpu_custom_call.1} parent=0 // pred_check
    _
  $region15: #{tpu_custom_call.1} parent=0 // pred_check_branch
    %1729 = sbr.rel (0) target = $region17
  $region16: #{tpu_custom_call.1} parent=0 // pred_region
    _
  $region17: #{tpu_custom_call.1} parent=0 // pred_fallthru
    _
  // Predicated region
  $region18: #{tpu_custom_call.1} parent=0 // pred_check
    _
  $region19: #{tpu_custom_call.1} parent=0 // pred_check_branch
    %1731 = sbr.rel (0) target = $region21
  $region20: #{tpu_custom_call.1} parent=0 // pred_region
    _
  $region21: #{tpu_custom_call.1} parent=0 // pred_fallthru
    _

</llo_original>
